<compile_context>
chip_gen: v7x
topology: tpu7x:2x2x1
jax: 0.10.0
libtpu: 0.0.40
codegen_flags: <defaults>
</compile_context>

<pallas_src>
import functools
import math

import jax
import jax.numpy as jnp
from jax.experimental import pallas as pl
from jax.experimental.pallas import tpu as pltpu

_VMEM_LIMIT = 64 * 1024 * 1024


def _round_up(x, m):
    return (x + m - 1) // m * m


def _pick_tile(dim_padded, pref):
    """Largest multiple of 128 <= pref that divides dim_padded (a multiple of 128)."""
    t = min(pref, dim_padded)
    while t > 128 and dim_padded % t:
        t -= 128
    return t


# ------------------------------------------------------------------
# Pallas kernel 1: tiled matmul + bias (+ optional tanh) — the conv hot path.
#   bf16 operands on the MXU, f32 accumulation, bf16 output.
# ------------------------------------------------------------------
def _matmul_bias_kernel(a_ref, b_ref, bias_ref, o_ref, acc_ref, *, activation):
    k = pl.program_id(2)

    @pl.when(k == 0)
    def _():
        acc_ref[...] = jnp.zeros_like(acc_ref)

    acc_ref[...] += jnp.dot(a_ref[...], b_ref[...],
                            preferred_element_type=jnp.float32)

    @pl.when(k == pl.num_programs(2) - 1)
    def _():
        y = acc_ref[...] + bias_ref[...]          # bias is f32
        if activation == "tanh":
            y = jnp.tanh(y)
        o_ref[...] = y.astype(o_ref.dtype)


def matmul_bias(a, wmat_p, bias_p, n_out, activation=None):
    """a: (M, K) with K already padded to wmat's K; wmat_p: (Kp, Np) bf16;
    bias_p: (1, Np) f32. Returns (M, n_out) bf16."""
    M, K = a.shape
    Kp, Np = wmat_p.shape
    a = a.astype(jnp.bfloat16)
    if K != Kp:                                   # fallback; callers pre-pad K
        a = jnp.pad(a, ((0, 0), (0, Kp - K)))

    tm = _pick_tile(_round_up(M, 128), 512)
    tn = _pick_tile(Np, 256)
    tk = _pick_tile(Kp, 1152)
    Mp = _round_up(M, tm)
    if Mp != M:                                   # only for tiny / unaligned M
        a = jnp.pad(a, ((0, Mp - M), (0, 0)))

    grid = (Mp // tm, Np // tn, Kp // tk)
    cost = pl.CostEstimate(
        flops=2 * Mp * Np * Kp,
        transcendentals=(Mp * Np if activation == "tanh" else 0),
        bytes_accessed=2 * (Mp * Kp + Kp * Np + Mp * Np) + 4 * Np)

    out = pl.pallas_call(
        functools.partial(_matmul_bias_kernel, activation=activation),
        out_shape=jax.ShapeDtypeStruct((Mp, Np), jnp.bfloat16),
        grid_spec=pltpu.PrefetchScalarGridSpec(
            num_scalar_prefetch=0,
            grid=grid,
            in_specs=[
                pl.BlockSpec((tm, tk), lambda i, j, k: (i, k)),
                pl.BlockSpec((tk, tn), lambda i, j, k: (k, j)),
                pl.BlockSpec((1, tn), lambda i, j, k: (0, j)),
            ],
            out_specs=pl.BlockSpec((tm, tn), lambda i, j, k: (i, j)),
            scratch_shapes=[pltpu.VMEM((tm, tn), jnp.float32)],
        ),
        compiler_params=pltpu.CompilerParams(
            dimension_semantics=("parallel", "parallel", "arbitrary"),
            vmem_limit_bytes=_VMEM_LIMIT),
        cost_estimate=cost,
    )(a, wmat_p, bias_p)
    return out[:M, :n_out]


# ------------------------------------------------------------------
# Pallas kernel 2: InstanceNorm2d (affine=False, biased var, eps=1e-5)
#   variants: +ReLU, +residual-add.  Small images: fused single-block kernel.
#   Large images: two-pass kernel tiling H*W (bounded VMEM, parallel work).
# ------------------------------------------------------------------
def _in_fused_kernel(x_ref, o_ref, *, relu, eps):
    x = x_ref[0].astype(jnp.float32)                    # (HW, C)
    mean = jnp.mean(x, axis=0, keepdims=True)
    xc = x - mean
    var = jnp.mean(xc * xc, axis=0, keepdims=True)
    y = xc * jax.lax.rsqrt(var + eps)
    if relu:
        y = jnp.maximum(y, 0.0)
    o_ref[0] = y.astype(o_ref.dtype)


def _in_fused_res_kernel(x_ref, r_ref, o_ref, *, eps):
    x = x_ref[0].astype(jnp.float32)
    mean = jnp.mean(x, axis=0, keepdims=True)
    xc = x - mean
    var = jnp.mean(xc * xc, axis=0, keepdims=True)
    y = xc * jax.lax.rsqrt(var + eps) + r_ref[0].astype(jnp.float32)
    o_ref[0] = y.astype(o_ref.dtype)


def _in_stats_kernel(x_ref, s_ref):
    @pl.when(pl.program_id(1) == 0)
    def _():
        s_ref[...] = jnp.zeros_like(s_ref)
    x = x_ref[0].astype(jnp.float32)                    # (thw, C)
    s = jnp.sum(x, axis=0, keepdims=True)
    sq = jnp.sum(x * x, axis=0, keepdims=True)
    s_ref[0] += jnp.concatenate([s, sq], axis=0)        # (2, C): [sum, sumsq]


def _in_apply_kernel(x_ref, s_ref, o_ref, *, relu, inv_hw, eps):
    x = x_ref[0].astype(jnp.float32)
    st = s_ref[0]                                       # (2, C) f32
    mean = st[0:1] * inv_hw
    var = jnp.maximum(st[1:2] * inv_hw - mean * mean, 0.0)
    y = (x - mean) * jax.lax.rsqrt(var + eps)
    if relu:
        y = jnp.maximum(y, 0.0)
    o_ref[0] = y.astype(o_ref.dtype)


def _in_apply_res_kernel(x_ref, s_ref, r_ref, o_ref, *, inv_hw, eps):
    x = x_ref[0].astype(jnp.float32)
    st = s_ref[0]
    mean = st[0:1] * inv_hw
    var = jnp.maximum(st[1:2] * inv_hw - mean * mean, 0.0)
    y = (x - mean) * jax.lax.rsqrt(var + eps) + r_ref[0].astype(jnp.float32)
    o_ref[0] = y.astype(o_ref.dtype)


def _hw_tile(hw, c, max_bytes=1 << 20):
    """Largest multiple-of-8 divisor of hw whose (thw, c) bf16 block fits
    max_bytes; hw itself if it already fits (-> single fused pass)."""
    max_rows = max(8, (max_bytes // (2 * c)) // 8 * 8)
    if hw <= max_rows or hw % 8:
        return hw
    t = min(max_rows, hw // 8 * 8)
    while t >= 8 and hw % t:
        t -= 8
    return t if t >= 8 else hw


def instance_norm_nhwc(x, relu=False, residual=None, eps=1e-5):
    """x: (N, H, W, C) bf16. Per-(n, c) normalization over H*W."""
    N, H, W, C = x.shape
    hw = H * W
    x2 = x.reshape(N, hw, C)
    thw = _hw_tile(hw, C)
    cparams = functools.partial(pltpu.CompilerParams,
                                vmem_limit_bytes=_VMEM_LIMIT)

    if thw == hw:
        # Small block: fused single pass, one (1, H*W, C) block per image.
        spec = pl.BlockSpec((1, hw, C), lambda n: (n, 0, 0))
        out_shape = jax.ShapeDtypeStruct((N, hw, C), jnp.bfloat16)
        if residual is None:
            out = pl.pallas_call(
                functools.partial(_in_fused_kernel, relu=relu, eps=eps),
                out_shape=out_shape,
                grid_spec=pltpu.PrefetchScalarGridSpec(
                    num_scalar_prefetch=0, grid=(N,),
                    in_specs=[spec], out_specs=spec),
                compiler_params=cparams(dimension_semantics=("parallel",)),
            )(x2)
        else:
            out = pl.pallas_call(
                functools.partial(_in_fused_res_kernel, eps=eps),
                out_shape=out_shape,
                grid_spec=pltpu.PrefetchScalarGridSpec(
                    num_scalar_prefetch=0, grid=(N,),
                    in_specs=[spec, spec], out_specs=spec),
                compiler_params=cparams(dimension_semantics=("parallel",)),
            )(x2, residual.reshape(N, hw, C))
        return out.reshape(N, H, W, C)

    # Two-pass, H*W tiled: stats accumulation (arbitrary axis) + normalize.
    T = hw // thw
    xspec = pl.BlockSpec((1, thw, C), lambda n, t: (n, t, 0))
    sspec = pl.BlockSpec((1, 2, C), lambda n, t: (n, 0, 0))
    stats = pl.pallas_call(
        _in_stats_kernel,
        out_shape=jax.ShapeDtypeStruct((N, 2, C), jnp.float32),
        grid_spec=pltpu.PrefetchScalarGridSpec(
            num_scalar_prefetch=0, grid=(N, T),
            in_specs=[xspec], out_specs=sspec),
        compiler_params=cparams(dimension_semantics=("parallel", "arbitrary")),
    )(x2)

    inv_hw = 1.0 / float(hw)
    out_shape = jax.ShapeDtypeStruct((N, hw, C), jnp.bfloat16)
    if residual is None:
        out = pl.pallas_call(
            functools.partial(_in_apply_kernel, relu=relu, inv_hw=inv_hw,
                              eps=eps),
            out_shape=out_shape,
            grid_spec=pltpu.PrefetchScalarGridSpec(
                num_scalar_prefetch=0, grid=(N, T),
                in_specs=[xspec, sspec], out_specs=xspec),
            compiler_params=cparams(
                dimension_semantics=("parallel", "parallel")),
        )(x2, stats)
    else:
        out = pl.pallas_call(
            functools.partial(_in_apply_res_kernel, inv_hw=inv_hw, eps=eps),
            out_shape=out_shape,
            grid_spec=pltpu.PrefetchScalarGridSpec(
                num_scalar_prefetch=0, grid=(N, T),
                in_specs=[xspec, sspec, xspec], out_specs=xspec),
            compiler_params=cparams(
                dimension_semantics=("parallel", "parallel")),
        )(x2, stats, residual.reshape(N, hw, C))
    return out.reshape(N, H, W, C)


# ------------------------------------------------------------------
# Glue: NHWC im2col / conv wrappers (plain JAX, no hot compute)
# ------------------------------------------------------------------
def _im2col_nhwc(x, kh, kw, stride, k_pad=0):
    """x: (N, H, W, C) already spatially padded -> (N*oh*ow, kh*kw*C + k_pad).
    Tap-major, channel-minor columns.  K padding (zero columns) is fused into
    the single concat, so no second full-size A copy is made."""
    N, H, W, C = x.shape
    oh = (H - kh) // stride + 1
    ow = (W - kw) // stride + 1
    taps = []
    for i in range(kh):
        for j in range(kw):
            taps.append(x[:, i:i + stride * oh:stride,
                          j:j + stride * ow:stride, :])
    if k_pad:
        taps.append(jnp.zeros((N, oh, ow, k_pad), x.dtype))
    patches = jnp.concatenate(taps, axis=-1)
    return patches.reshape(N * oh * ow, kh * kw * C + k_pad), oh, ow


def conv2d_nhwc(x, layer, activation=None):
    assert x.shape[-1] == layer["in_c"], (x.shape, layer["in_c"])
    pad = layer["pad"]
    if pad:
        mode = "reflect" if layer["pad_mode"] == "reflect" else "constant"
        x = jnp.pad(x, ((0, 0), (pad, pad), (pad, pad), (0, 0)), mode=mode)
    patches, oh, ow = _im2col_nhwc(x, layer["kh"], layer["kw"],
                                   layer["stride"], k_pad=layer["k_pad"])
    out = matmul_bias(patches, layer["wmat"], layer["bias"], layer["out_c"],
                      activation=activation)
    N = x.shape[0]
    return out.reshape(N, oh, ow, layer["out_c"])


def conv_transpose2d_nhwc(x, layer):
    """ConvTranspose2d(k=3, s=2, p=1, op=1) as ONE matmul: the 4 stride phases
    share a 2x2 tap footprint on the (bottom/right zero-padded) input, their
    weights are concatenated along N, and a depth-to-space reshape interleaves
    the phases.  Output carries 128-padded channels (padded channels == 0)."""
    N, H, W, C = x.shape
    assert C == layer["in_c"], (x.shape, layer["in_c"])
    Op = layer["out_cp"]
    xp = jnp.pad(x, ((0, 0), (0, 1), (0, 1), (0, 0)))
    patches, _, _ = _im2col_nhwc(xp, 2, 2, 1, k_pad=layer["k_pad"])
    y = matmul_bias(patches, layer["wmat"], layer["bias"], 4 * Op)
    y = y.reshape(N, H, W, 2, 2, Op)
    y = jnp.transpose(y, (0, 1, 3, 2, 4, 5)).reshape(N, 2 * H, 2 * W, Op)
    return y


# ------------------------------------------------------------------
# Parameter init (deterministic, PyTorch default-like uniform bounds)
# ------------------------------------------------------------------
def _init_conv(key, out_c, in_c, k):
    kw_, kb_ = jax.random.split(key)
    bound = 1.0 / math.sqrt(in_c * k * k)
    w = jax.random.uniform(kw_, (out_c, in_c, k, k), jnp.float32, -bound, bound)
    b = jax.random.uniform(kb_, (out_c,), jnp.float32, -bound, bound)
    return w, b


def _init_convT(key, in_c, out_c, k):
    kw_, kb_ = jax.random.split(key)
    bound = 1.0 / math.sqrt(out_c * k * k)
    w = jax.random.uniform(kw_, (in_c, out_c, k, k), jnp.float32, -bound, bound)
    b = jax.random.uniform(kb_, (out_c,), jnp.float32, -bound, bound)
    return w, b


def init_params(key, input_nc, output_nc, ngf=64, n_blocks=9):
    keys = iter(jax.random.split(key, 8 + 2 * n_blocks))
    params = {}
    params["c0"] = _init_conv(next(keys), ngf, input_nc, 7)
    params["down"] = []
    for i in range(2):
        mult = 2 ** i
        params["down"].append(_init_conv(next(keys), ngf * mult * 2, ngf * mult, 3))
    mult = 4
    params["blocks"] = []
    for _ in range(n_blocks):
        c1 = _init_conv(next(keys), ngf * mult, ngf * mult, 3)
        c2 = _init_conv(next(keys), ngf * mult, ngf * mult, 3)
        params["blocks"].append((c1, c2))
    params["up"] = []
    for i in range(2):
        m = 2 ** (2 - i)
        params["up"].append(_init_convT(next(keys), ngf * m, ngf * m // 2, 3))
    params["c_last"] = _init_conv(next(keys), output_nc, ngf, 7)
    return params


# ------------------------------------------------------------------
# One-time weight preparation (hoisted out of the forward pass)
# ------------------------------------------------------------------
def _pad_wmat(wmat):
    K, Nc = wmat.shape
    Kp, Np = _round_up(K, 128), _round_up(Nc, 128)
    wmat = wmat.astype(jnp.bfloat16)
    if (Kp, Np) == (K, Nc):
        return wmat
    return jnp.zeros((Kp, Np), jnp.bfloat16).at[:K, :Nc].set(wmat)


def _pad_bias(b):
    Nc = b.shape[0]
    Np = _round_up(Nc, 128)
    return jnp.zeros((1, Np), jnp.float32).at[0, :Nc].set(b.astype(jnp.float32))


def _prep_conv(w, b, stride, pad, pad_mode, in_carry=None):
    """w: (O, C, kh, kw) Conv2d layout. in_carry: channel count of the incoming
    (possibly 128-padded) activation; extra input channels get zero weights."""
    O, C, kh, kw = w.shape
    if in_carry is None:
        in_carry = C
    if in_carry != C:
        w = jnp.zeros((O, in_carry, kh, kw), w.dtype).at[:, :C].set(w)
    wmat = w.transpose(2, 3, 1, 0).reshape(kh * kw * in_carry, O)
    wmat_p = _pad_wmat(wmat)
    return dict(wmat=wmat_p, bias=_pad_bias(b), out_c=O, kh=kh, kw=kw,
                stride=stride, pad=pad, pad_mode=pad_mode, in_c=in_carry,
                k_pad=wmat_p.shape[0] - kh * kw * in_carry)


def _prep_convT(w, b, in_carry=None):
    """w: (C_in, C_out, 3, 3) ConvTranspose2d layout -> one fused 2x2 conv with
    4 * round_up(C_out, 128) output channels (the 4 stride phases along N)."""
    C_in, C_out, kh, kw = w.shape
    assert (kh, kw) == (3, 3)
    if in_carry is None:
        in_carry = C_in
    if in_carry != C_in:
        w = jnp.zeros((in_carry, C_out, kh, kw), w.dtype).at[:C_in].set(w)
    Ci = in_carry
    w_conv = jnp.flip(w, axis=(2, 3)).transpose(1, 0, 2, 3)     # (O, Ci, 3, 3)
    Op = _round_up(C_out, 128)
    # footprint row/col 0 -> input (yo, xo); 1 -> (yo+1, xo+1).
    # output parity 0 uses conv tap 1; parity 1 uses taps 0 (row yo) and 2 (+1).
    tapmap = {0: ((0, 1),), 1: ((0, 0), (1, 2))}
    mats = []
    for a in (0, 1):
        for c in (0, 1):
            wp = jnp.zeros((C_out, Ci, 2, 2), jnp.float32)
            for fr, kr in tapmap[a]:
                for fc, kc in tapmap[c]:
                    wp = wp.at[:, :, fr, fc].set(w_conv[:, :, kr, kc])
            wmat = wp.transpose(2, 3, 1, 0).reshape(4 * Ci, C_out)
            mats.append(jnp.zeros((4 * Ci, Op), jnp.float32)
                        .at[:, :C_out].set(wmat))
    wmat_all = jnp.concatenate(mats, axis=1)                    # (4*Ci, 4*Op)
    wmat_p = _pad_wmat(wmat_all)
    bias1 = jnp.zeros((Op,), jnp.float32).at[:C_out].set(b.astype(jnp.float32))
    bias4 = jnp.tile(bias1, 4).reshape(1, 4 * Op)
    return dict(wmat=wmat_p, bias=bias4, out_c=C_out, out_cp=Op, in_c=Ci,
                k_pad=wmat_p.shape[0] - 4 * Ci)


def prepare_params(params):
    prep = {}
    w, b = params["c0"]
    prep["c0"] = _prep_conv(w, b, stride=1, pad=3, pad_mode="reflect")
    prep["down"] = [_prep_conv(w, b, stride=2, pad=1, pad_mode="zero")
                    for (w, b) in params["down"]]
    prep["blocks"] = [(_prep_conv(w1, b1, 1, 1, "reflect"),
                       _prep_conv(w2, b2, 1, 1, "reflect"))
                      for (w1, b1), (w2, b2) in params["blocks"]]
    prep["up"] = []
    carry = None
    for (w, b) in params["up"]:
        layer = _prep_convT(w, b, in_carry=carry)
        prep["up"].append(layer)
        carry = layer["out_cp"]
    w, b = params["c_last"]
    prep["c_last"] = _prep_conv(w, b, stride=1, pad=3, pad_mode="reflect",
                                in_carry=carry)
    return prep


# ------------------------------------------------------------------
# Forward pass (mirrors ResnetGenerator.forward). NCHW boundary, NHWC bf16
# internally; the up path carries 128-padded (all-zero) extra channels.
# ------------------------------------------------------------------
def resnet_generator(prep, x_nchw):
    x = jnp.transpose(x_nchw, (0, 2, 3, 1)).astype(jnp.bfloat16)
    # ReflectionPad(3) + Conv7 + IN + ReLU
    y = conv2d_nhwc(x, prep["c0"])
    y = instance_norm_nhwc(y, relu=True)
    # Downsampling: Conv3 s2 p1 + IN + ReLU (x2)
    for layer in prep["down"]:
        y = conv2d_nhwc(y, layer)
        y = instance_norm_nhwc(y, relu=True)
    # Resnet blocks: x + [ReflPad1+Conv3+IN+ReLU+ReflPad1+Conv3+IN](x)
    for l1, l2 in prep["blocks"]:
        res = y
        h = conv2d_nhwc(y, l1)
        h = instance_norm_nhwc(h, relu=True)
        h = conv2d_nhwc(h, l2)
        y = instance_norm_nhwc(h, residual=res)
    # Upsampling: ConvT3 s2 p1 op1 (single fused matmul + d2s) + IN + ReLU (x2)
    for layer in prep["up"]:
        y = conv_transpose2d_nhwc(y, layer)
        y = instance_norm_nhwc(y, relu=True)
    # ReflectionPad(3) + Conv7 + Tanh (tanh fused in the matmul epilogue)
    y = conv2d_nhwc(y, prep["c_last"], activation="tanh")
    return jnp.transpose(y, (0, 3, 1, 2)).astype(jnp.float32)


if __name__ == "__main__":
    # ---- unit checks for the restructured pieces --------------------------
    # (1) two-pass (HW-tiled) InstanceNorm vs plain-JAX reference.
    xin = jax.random.normal(jax.random.PRNGKey(2), (1, 64, 64, 256),
                            jnp.float32).astype(jnp.bfloat16)
    got = instance_norm_nhwc(xin, relu=True).astype(jnp.float32)
    xf = xin.astype(jnp.float32)
    mu = xf.mean(axis=(1, 2), keepdims=True)
    va = ((xf - mu) ** 2).mean(axis=(1, 2), keepdims=True)
    ref = jnp.maximum((xf - mu) * jax.lax.rsqrt(va + 1e-5), 0.0)
    err = float(jnp.max(jnp.abs(got - ref)))
    assert err < 5e-2, f"instance_norm (two-pass) mismatch: {err}"

    # (2) fused single-matmul ConvTranspose vs lax reference.
    Ci, Co = 32, 16
    wT, bT = _init_convT(jax.random.PRNGKey(3), Ci, Co, 3)
    layerT = _prep_convT(wT, bT)
    xt = jax.random.normal(jax.random.PRNGKey(4), (2, 8, 8, Ci),
                           jnp.float32).astype(jnp.bfloat16)
    got = conv_transpose2d_nhwc(xt, layerT)[..., :Co].astype(jnp.float32)
    w_ref = jnp.flip(wT, axis=(2, 3)).transpose(1, 0, 2, 3)
    w_ref = w_ref.astype(jnp.bfloat16).astype(jnp.float32)
    ref = jax.lax.conv_general_dilated(
        jnp.transpose(xt.astype(jnp.float32), (0, 3, 1, 2)), w_ref,
        window_strides=(1, 1), padding=((1, 2), (1, 2)), lhs_dilation=(2, 2),
        dimension_numbers=("NCHW", "OIHW", "NCHW"),
        precision=jax.lax.Precision.HIGHEST) + bT.reshape(1, Co, 1, 1)
    ref = jnp.transpose(ref, (0, 2, 3, 1))
    err = float(jnp.max(jnp.abs(got - ref)))
    assert err < 5e-2, f"conv_transpose mismatch: {err}"

    # (3) strided conv (fused K-pad im2col) vs lax reference.
    Ci2, Co2 = 16, 32
    wc, bc = _init_conv(jax.random.PRNGKey(5), Co2, Ci2, 3)
    layerc = _prep_conv(wc, bc, stride=2, pad=1, pad_mode="zero")
    xc = jax.random.normal(jax.random.PRNGKey(6), (2, 8, 8, Ci2),
                           jnp.float32).astype(jnp.bfloat16)
    got = conv2d_nhwc(xc, layerc).astype(jnp.float32)
    ref = jax.lax.conv_general_dilated(
        jnp.transpose(xc.astype(jnp.float32), (0, 3, 1, 2)),
        wc.astype(jnp.bfloat16).astype(jnp.float32),
        window_strides=(2, 2), padding=((1, 1), (1, 1)),
        dimension_numbers=("NCHW", "OIHW", "NCHW"),
        precision=jax.lax.Precision.HIGHEST) + bc.reshape(1, Co2, 1, 1)
    ref = jnp.transpose(ref, (0, 2, 3, 1))
    err = float(jnp.max(jnp.abs(got - ref)))
    assert err < 5e-2, f"strided conv mismatch: {err}"

    # ---- full generator at small shapes ------------------------------------
    input_nc, output_nc, ngf, n_blocks = 3, 3, 8, 2
    x = jax.random.normal(jax.random.PRNGKey(0), (2, input_nc, 16, 16),
                          jnp.float32)
    params = init_params(jax.random.PRNGKey(1), input_nc, output_nc, ngf,
                         n_blocks)
    prep = prepare_params(params)   # weight reshape/cast/pad hoisted out

    fwd = jax.jit(functools.partial(resnet_generator, prep))
    y = fwd(x)
    jax.block_until_ready(y)
    assert y.shape == (2, output_nc, 16, 16), y.shape
    assert bool(jnp.all(jnp.isfinite(y)))
    print("KERNEL_OK")
</pallas_src>

<mosaic_0001>
module attributes {stable_mosaic.version = 11 : i64} {
  func.func @_in_stats_kernel(%arg0: i32, %arg1: i32, %arg2: memref<1x2048x256xbf16, #tpu.memory_space<vmem>>, %arg3: memref<1x2x256xf32, #tpu.memory_space<vmem>>) attributes {dimension_semantics = [#tpu.dimension_semantics<parallel>, #tpu.dimension_semantics<arbitrary>], iteration_bounds = array<i64: 1, 2>, scalar_prefetch = 0 : i64, scratch_operands = 0 : i64, tpu.core_type = #tpu.core_type<tc>, window_params = [{transform_indices = @transform_0, window_bounds = array<i64: 1, 2048, 256>}, {transform_indices = @transform_1, window_bounds = array<i64: 1, 2, 256>}]} {
    %c0_i32 = arith.constant 0 : i32
    %0 = arith.cmpi eq, %arg1, %c0_i32 : i32
    %1 = arith.extui %0 : i1 to i32
    %c0_i32_0 = arith.constant 0 : i32
    %2 = arith.cmpi ne, %1, %c0_i32_0 : i32
    scf.if %2 {
      %cst_10 = arith.constant 0.000000e+00 : f32
      %18 = vector.broadcast %cst_10 : f32 to vector<1x2x256xf32>
      %c0_11 = arith.constant 0 : index
      %c0_12 = arith.constant 0 : index
      %c0_13 = arith.constant 0 : index
      %19 = vector.load %arg3[%c0_11, %c0_12, %c0_13] : memref<1x2x256xf32, #tpu.memory_space<vmem>>, vector<1x2x256xf32>
      tpu.vector_store %arg3[%c0_11, %c0_12, %c0_13], %18 {strides = array<i32>} : memref<1x2x256xf32, #tpu.memory_space<vmem>>, vector<1x2x256xf32>,
    } else {
    }
    %c0 = arith.constant 0 : index
    %c0_1 = arith.constant 0 : index
    %c0_2 = arith.constant 0 : index
    %3 = vector.load %arg2[%c0, %c0_1, %c0_2] : memref<1x2048x256xbf16, #tpu.memory_space<vmem>>, vector<1x2048x256xbf16>
    %4 = vector.shape_cast %3 : vector<1x2048x256xbf16> to vector<2048x256xbf16>
    %5 = arith.extf %4 : vector<2048x256xbf16> to vector<2048x256xf32>
    %cst = arith.constant dense<0.000000e+00> : vector<256xf32>
    %6 = vector.multi_reduction <add>, %5, %cst [0] : vector<2048x256xf32> to vector<256xf32>
    %7 = vector.shape_cast %6 : vector<256xf32> to vector<1x256xf32>
    %8 = arith.mulf %5, %5 : vector<2048x256xf32>
    %cst_3 = arith.constant dense<0.000000e+00> : vector<256xf32>
    %9 = vector.multi_reduction <add>, %8, %cst_3 [0] : vector<2048x256xf32> to vector<256xf32>
    %10 = vector.shape_cast %9 : vector<256xf32> to vector<1x256xf32>
    %c0_4 = arith.constant 0 : index
    %c0_5 = arith.constant 0 : index
    %c0_6 = arith.constant 0 : index
    %11 = vector.load %arg3[%c0_4, %c0_5, %c0_6] : memref<1x2x256xf32, #tpu.memory_space<vmem>>, vector<1x2x256xf32>
    %12 = vector.shape_cast %11 : vector<1x2x256xf32> to vector<2x256xf32>
    %13 = tpu.concatenate %7, %10 in 0 : vector<1x256xf32>, vector<1x256xf32> -> vector<2x256xf32>
    %14 = arith.addf %12, %13 : vector<2x256xf32>
    %c0_7 = arith.constant 0 : index
    %c0_8 = arith.constant 0 : index
    %c0_9 = arith.constant 0 : index
    %15 = vector.load %arg3[%c0_7, %c0_8, %c0_9] : memref<1x2x256xf32, #tpu.memory_space<vmem>>, vector<1x2x256xf32>
    %16 = vector.shape_cast %15 : vector<1x2x256xf32> to vector<2x256xf32>
    %17 = vector.shape_cast %14 : vector<2x256xf32> to vector<1x2x256xf32>
    tpu.vector_store %arg3[%c0_7, %c0_8, %c0_9], %17 {strides = array<i32>} : memref<1x2x256xf32, #tpu.memory_space<vmem>>, vector<1x2x256xf32>,
    return
  }
  func.func @transform_0(%arg0: i32, %arg1: i32) -> (i32, i32, i32) {
    %c0_i32 = arith.constant 0 : i32
    %c0_i32_0 = arith.constant 0 : i32
    return %arg0, %arg1, %c0_i32 : i32, i32, i32
  }
  func.func @transform_1(%arg0: i32, %arg1: i32) -> (i32, i32, i32) {
    %c0_i32 = arith.constant 0 : i32
    %c0_i32_0 = arith.constant 0 : i32
    %c0_i32_1 = arith.constant 0 : i32
    return %arg0, %c0_i32, %c0_i32_0 : i32, i32, i32
  }
}

</mosaic_0001>

<llo_original>
// kernel: tpu_custom_call.1
$region0: #{tpu_custom_call.1}
  #allocation0 [shape = 'u32[]', space=smem, size = 0x4, offset = 0x4, fixed_abs, tag = 'smem constant byte address 0x4 - core index']
  #allocation1 [shape = 'u32[144,128]{1,0:T(1,128)}', space=vmem, size = 0x12000, scoped, tag = 'internal scratch']
  %s0 = inlined_call_operand.hbm [shape: bf16[1,4096,256], index: 0, kind: input, shape index: {}]
  %s1 = inlined_call_operand.hbm [shape: f32[1,2,256], index: 1, kind: output, shape index: {}]
  %s2 = sld [smem:[#allocation0]]
  $region45: #{tpu_custom_call.1} parent=0
    _
  %s4 = ssub.s32 1, %s2
  %s5 = scalar_select 0, %s4, %s2
  $region1: #{tpu_custom_call.1} parent=0
    #allocation2 [shape = 'u8[2097152]{0}', space=vmem, size = 0x200000, scoped, tag = 'input window, operand 0']
    #allocation3 [shape = 's32[2]{0}', space=sflag, size = 0x8, scoped, tag = 'scoped memory for tpu_custom_call.1']
    #allocation4 [shape = 's32[2]{0}', space=sflag, size = 0x8, scoped, tag = 'scoped memory for tpu_custom_call.1']
    #allocation5 [shape = 'u8[2048]{0}', space=vmem, size = 0x800, scoped, tag = 'output window, operand 0, single buffered']
    %6 = vsyncpa [#allocation3], 0
    %s7 = scalar_lea.sflag [#allocation3], 1
    %8 = vsyncpa %s7, 0
    %9 = vsyncpa [#allocation4], 0
    loop: start=0, step=1, limit=4
    $region2: #{tpu_custom_call.1} parent=1 // loop_pre_header
      _
    $region3: #{tpu_custom_call.1} parent=1 // loop_header
      %s11 = sphi 0, %s15
      %p12 = scmp.ge.s32.totalorder %s11, 4
      %s18 = sphi 0, %s30
      %s19 = sphi 0, %s26
      %s20 = sphi 0, %s18
      %s21 = sphi 0, %s19
      %s22 = sphi 0, %s20
      %s23 = sphi 0, %s21
      %s35 = sphi 0, %s37
      %s38 = sphi 0, %s35
      %s39 = sphi 0, %s38
      %s55 = sphi 0, %s39
      %s61 = sphi 0, %s63
      %s64 = sphi 0, %s61
      %s65 = sphi 0, %s64
      %s81 = sphi 0, %s65
    $region4: #{tpu_custom_call.1} parent=1 // loop_header_branch
      %14 = sbr.rel (%p12) target = $region8
    $region5: #{tpu_custom_call.1} parent=1 // loop_body
      %s16 = ssub.s32 %s11, 1
      %s17 = ssub.s32 %s11, 2
      %s24 = sadd.s32 1, %s19
      %p25 = scmp.ge.s32.totalorder %s24, 2
      %s26 = scalar_select %p25, 0, %s24
      %s27 = sadd.s32 1, %s18
      %s28 = scalar_select %p25, %s27, %s18
      %p29 = scmp.ge.s32.totalorder %s28, 1
      %s30 = scalar_select %p29, 0, %s28
      %s31 = ssub.s32 %s18, %s30
      %s32 = ssub.s32 %s19, %s26
      %s33 = sor.u32 %s31, %s32
      %p34 = scmp.eq.s32.totalorder %s33, 0
      %s36 = sadd.s32 %s35, 1
      %s37 = scalar_select %p34, %s35, %s36
      %p40 = pneg %p34
      %p41 = scmp.eq.s32.totalorder %s11, 1
      %p42 = por %p40, %p41
      %p43 = scmp.ne.s32.totalorder %s35, %s38
      %p44 = scmp.eq.s32.totalorder %s11, 0
      %p45 = por %p43, %p44
      %p46 = scmp.ne.s32.totalorder %s35, %s38
      %p47 = scmp.eq.s32.totalorder %s16, 1
      %p48 = por %p46, %p47
      %p49 = scmp.ne.s32.totalorder %s38, %s39
      %p50 = scmp.eq.s32.totalorder %s16, 0
      %p51 = por %p49, %p50
      %p52 = scmp.ne.s32.totalorder %s38, %s39
      %p53 = scmp.eq.s32.totalorder %s17, 1
      %p54 = por %p52, %p53
      %p56 = scmp.ne.s32.totalorder %s39, %s55
      %p57 = scmp.eq.s32.totalorder %s17, 0
      %p58 = por %p56, %p57
      %s59 = ssub.s32 %s18, %s30
      %p60 = scmp.eq.s32.totalorder %s59, 0
      %s62 = sadd.s32 %s61, 1
      %s63 = scalar_select %p60, %s61, %s62
      %p66 = pneg %p60
      %p67 = scmp.eq.s32.totalorder %s11, 1
      %p68 = por %p66, %p67
      %p69 = scmp.ne.s32.totalorder %s61, %s64
      %p70 = scmp.eq.s32.totalorder %s11, 0
      %p71 = por %p69, %p70
      %p72 = scmp.ne.s32.totalorder %s61, %s64
      %p73 = scmp.eq.s32.totalorder %s16, 1
      %p74 = por %p72, %p73
      %p75 = scmp.ne.s32.totalorder %s64, %s65
      %p76 = scmp.eq.s32.totalorder %s16, 0
      %p77 = por %p75, %p76
      %p78 = scmp.ne.s32.totalorder %s64, %s65
      %p79 = scmp.eq.s32.totalorder %s17, 1
      %p80 = por %p78, %p79
      %p82 = scmp.ne.s32.totalorder %s65, %s81
      %p83 = scmp.eq.s32.totalorder %s17, 0
      %p84 = por %p82, %p83
      %p85 = scmp.le.s32.totalorder 1, %s11
      %p86 = scmp.lt.s32.totalorder %s11, 3
      %p87 = pnand %p85, %p86
      %p88 = pneg %p87
      // Predicated region
      $region9: #{tpu_custom_call.1} parent=5 // pred_check
        _
      $region10: #{tpu_custom_call.1} parent=5 // pred_check_branch
        %90 = sbr.rel (%p87) target = $region12
      $region11: #{tpu_custom_call.1} parent=5 // pred_region
        %s91 = ssub.s32 %s11, 1
      $region12: #{tpu_custom_call.1} parent=5 // pred_fallthru
        _
      %p92 = scmp.lt.s32.totalorder %s11, 2
      // Predicated region
      $region13: #{tpu_custom_call.1} parent=5 // pred_check
        %p93 = pneg %p92
      $region14: #{tpu_custom_call.1} parent=5 // pred_check_branch
        %95 = sbr.rel (%p93) target = $region16
      $region15: #{tpu_custom_call.1} parent=5 // pred_region
        // Predicated region
        $region17: #{tpu_custom_call.1} parent=15 // pred_check
          %p96 = pneg %p45
        $region18: #{tpu_custom_call.1} parent=15 // pred_check_branch
          %98 = sbr.rel (%p96) target = $region20
        $region19: #{tpu_custom_call.1} parent=15 // pred_region
          %s99 = sand.u32 %s35, 1
          %s100 = scalar_lea.sflag [#allocation3], %s99
          %s101 = sand.u32 %s35, 1
          %s102 = smul.addr %s101, 2048
          %s103 = scalar_lea.vmem [#allocation2], %s102
          %s104 = smul.u32 256, %s19
          %s106 = ssub.s32 32768, 32768
          %107 = vsyncadd %s100, %s106
          %s108 = smul.addr %s104, 2
          %s109 = smul.addr %s18, 1024
          %s110 = sadd.s32 %s108, %s109
          %s111 = smul.addr %s110, 64
          %s112 = scalar_lea.hbm %s0, %s111
          %s113 = sshll.u32 %s103, 4
          %s114 = int_to_ptr.vmem [resolvable:$true] %s113
          %119 = dma.hbm_to_vmem [thread:$0]  %s112, 32768, %s114, %s100, 128, 128, 8
        $region20: #{tpu_custom_call.1} parent=15 // pred_fallthru
          _
      $region16: #{tpu_custom_call.1} parent=5 // pred_fallthru
        _
      %p120 = scmp.le.s32.totalorder 1, %s11
      %p121 = scmp.lt.s32.totalorder %s11, 3
      %p122 = pnand %p120, %p121
      %p123 = pneg %p122
      // Predicated region
      $region21: #{tpu_custom_call.1} parent=5 // pred_check
        _
      $region22: #{tpu_custom_call.1} parent=5 // pred_check_branch
        %125 = sbr.rel (%p122) target = $region24
      $region23: #{tpu_custom_call.1} parent=5 // pred_region
        %s126 = ssub.s32 %s11, 1
        %s127 = sand.u32 %s38, 1
        %s128 = scalar_lea.sflag [#allocation3], %s127
        %s129 = sand.u32 %s38, 1
        %s130 = smul.addr %s129, 2048
        %s131 = scalar_lea.vmem [#allocation2], %s130
        // Predicated region
        $region25: #{tpu_custom_call.1} parent=23 // pred_check
          %p132 = pneg %p51
        $region26: #{tpu_custom_call.1} parent=23 // pred_check_branch
          %134 = sbr.rel (%p132) target = $region28
        $region27: #{tpu_custom_call.1} parent=23 // pred_region
          %135 = dma.done %s128, 32768
        $region28: #{tpu_custom_call.1} parent=23 // pred_fallthru
          _
        %s136 = sand.u32 %s38, 1
        %s137 = scalar_lea.sflag [#allocation3], %s136
        %s138 = sand.u32 %s38, 1
        %s139 = smul.addr %s138, 2048
        %s140 = scalar_lea.vmem [#allocation2], %s139
        %p141 = pneg %p51
        %p142 = pneg %p48
        %p143 = pneg %p77
        %p144 = pneg %p74
        %s145 = smul.u32 256, %s21
        %p146 = scmp.eq.s32.totalorder %s21, 0
        // Predicated region
        $region29: #{tpu_custom_call.1} parent=23 // pred_check
          %p147 = pneg %p146
        $region30: #{tpu_custom_call.1} parent=23 // pred_check_branch
          %149 = sbr.rel (%p147) target = $region32
        $region31: #{tpu_custom_call.1} parent=23 // pred_region
          %150 = vst [vmem:[#allocation5] sm:$0xf] 0.0
        $region32: #{tpu_custom_call.1} parent=23 // pred_fallthru
          _
        %v151 = vld [vmem:[%s131] sm:$0xff]
        %v152 = vld [vmem:[%s131 + $0x8] sm:$0xff]
        %v153 = vld [vmem:[%s131 + $0x10] sm:$0xff]
        %v154 = vld [vmem:[%s131 + $0x18] sm:$0xff]
        %v155 = vld [vmem:[%s131 + $0x20] sm:$0xff]
        %v156 = vld [vmem:[%s131 + $0x28] sm:$0xff]
        %v157 = vld [vmem:[%s131 + $0x30] sm:$0xff]
        %v158 = vld [vmem:[%s131 + $0x38] sm:$0xff]
        %v159 = vld [vmem:[%s131 + $0x40] sm:$0xff]
        %v160 = vld [vmem:[%s131 + $0x48] sm:$0xff]
        %v161 = vld [vmem:[%s131 + $0x50] sm:$0xff]
        %v162 = vld [vmem:[%s131 + $0x58] sm:$0xff]
        %v163 = vld [vmem:[%s131 + $0x60] sm:$0xff]
        %v164 = vld [vmem:[%s131 + $0x68] sm:$0xff]
        %v165 = vld [vmem:[%s131 + $0x70] sm:$0xff]
        %v166 = vld [vmem:[%s131 + $0x78] sm:$0xff]
        %v167 = vld [vmem:[%s131 + $0x80] sm:$0xff]
        %v168 = vld [vmem:[%s131 + $0x88] sm:$0xff]
        %v169 = vld [vmem:[%s131 + $0x90] sm:$0xff]
        %v170 = vld [vmem:[%s131 + $0x98] sm:$0xff]
        %v171 = vld [vmem:[%s131 + $0xa0] sm:$0xff]
        %v172 = vld [vmem:[%s131 + $0xa8] sm:$0xff]
        %v173 = vld [vmem:[%s131 + $0xb0] sm:$0xff]
        %v174 = vld [vmem:[%s131 + $0xb8] sm:$0xff]
        %v175 = vld [vmem:[%s131 + $0xc0] sm:$0xff]
        %v176 = vld [vmem:[%s131 + $0xc8] sm:$0xff]
        %v177 = vld [vmem:[%s131 + $0xd0] sm:$0xff]
        %v178 = vld [vmem:[%s131 + $0xd8] sm:$0xff]
        %v179 = vld [vmem:[%s131 + $0xe0] sm:$0xff]
        %v180 = vld [vmem:[%s131 + $0xe8] sm:$0xff]
        %v181 = vld [vmem:[%s131 + $0xf0] sm:$0xff]
        %v182 = vld [vmem:[%s131 + $0xf8] sm:$0xff]
        %v183 = vld [vmem:[%s131 + $0x100] sm:$0xff]
        %v184 = vld [vmem:[%s131 + $0x108] sm:$0xff]
        %v185 = vld [vmem:[%s131 + $0x110] sm:$0xff]
        %v186 = vld [vmem:[%s131 + $0x118] sm:$0xff]
        %v187 = vld [vmem:[%s131 + $0x120] sm:$0xff]
        %v188 = vld [vmem:[%s131 + $0x128] sm:$0xff]
        %v189 = vld [vmem:[%s131 + $0x130] sm:$0xff]
        %v190 = vld [vmem:[%s131 + $0x138] sm:$0xff]
        %v191 = vld [vmem:[%s131 + $0x140] sm:$0xff]
        %v192 = vld [vmem:[%s131 + $0x148] sm:$0xff]
        %v193 = vld [vmem:[%s131 + $0x150] sm:$0xff]
        %v194 = vld [vmem:[%s131 + $0x158] sm:$0xff]
        %v195 = vld [vmem:[%s131 + $0x160] sm:$0xff]
        %v196 = vld [vmem:[%s131 + $0x168] sm:$0xff]
        %v197 = vld [vmem:[%s131 + $0x170] sm:$0xff]
        %v198 = vld [vmem:[%s131 + $0x178] sm:$0xff]
        %v199 = vld [vmem:[%s131 + $0x180] sm:$0xff]
        %v200 = vld [vmem:[%s131 + $0x188] sm:$0xff]
        %v201 = vld [vmem:[%s131 + $0x190] sm:$0xff]
        %v202 = vld [vmem:[%s131 + $0x198] sm:$0xff]
        %v203 = vld [vmem:[%s131 + $0x1a0] sm:$0xff]
        %v204 = vld [vmem:[%s131 + $0x1a8] sm:$0xff]
        %v205 = vld [vmem:[%s131 + $0x1b0] sm:$0xff]
        %v206 = vld [vmem:[%s131 + $0x1b8] sm:$0xff]
        %v207 = vld [vmem:[%s131 + $0x1c0] sm:$0xff]
        %v208 = vld [vmem:[%s131 + $0x1c8] sm:$0xff]
        %v209 = vld [vmem:[%s131 + $0x1d0] sm:$0xff]
        %v210 = vld [vmem:[%s131 + $0x1d8] sm:$0xff]
        %v211 = vld [vmem:[%s131 + $0x1e0] sm:$0xff]
        %v212 = vld [vmem:[%s131 + $0x1e8] sm:$0xff]
        %v213 = vld [vmem:[%s131 + $0x1f0] sm:$0xff]
        %v214 = vld [vmem:[%s131 + $0x1f8] sm:$0xff]
        %v215 = vld [vmem:[%s131 + $0x200] sm:$0xff]
        %v216 = vld [vmem:[%s131 + $0x208] sm:$0xff]
        %v217 = vld [vmem:[%s131 + $0x210] sm:$0xff]
        %v218 = vld [vmem:[%s131 + $0x218] sm:$0xff]
        %v219 = vld [vmem:[%s131 + $0x220] sm:$0xff]
        %v220 = vld [vmem:[%s131 + $0x228] sm:$0xff]
        %v221 = vld [vmem:[%s131 + $0x230] sm:$0xff]
        %v222 = vld [vmem:[%s131 + $0x238] sm:$0xff]
        %v223 = vld [vmem:[%s131 + $0x240] sm:$0xff]
        %v224 = vld [vmem:[%s131 + $0x248] sm:$0xff]
        %v225 = vld [vmem:[%s131 + $0x250] sm:$0xff]
        %v226 = vld [vmem:[%s131 + $0x258] sm:$0xff]
        %v227 = vld [vmem:[%s131 + $0x260] sm:$0xff]
        %v228 = vld [vmem:[%s131 + $0x268] sm:$0xff]
        %v229 = vld [vmem:[%s131 + $0x270] sm:$0xff]
        %v230 = vld [vmem:[%s131 + $0x278] sm:$0xff]
        %v231 = vld [vmem:[%s131 + $0x280] sm:$0xff]
        %v232 = vld [vmem:[%s131 + $0x288] sm:$0xff]
        %v233 = vld [vmem:[%s131 + $0x290] sm:$0xff]
        %v234 = vld [vmem:[%s131 + $0x298] sm:$0xff]
        %v235 = vld [vmem:[%s131 + $0x2a0] sm:$0xff]
        %v236 = vld [vmem:[%s131 + $0x2a8] sm:$0xff]
        %v237 = vld [vmem:[%s131 + $0x2b0] sm:$0xff]
        %v238 = vld [vmem:[%s131 + $0x2b8] sm:$0xff]
        %v239 = vld [vmem:[%s131 + $0x2c0] sm:$0xff]
        %v240 = vld [vmem:[%s131 + $0x2c8] sm:$0xff]
        %v241 = vld [vmem:[%s131 + $0x2d0] sm:$0xff]
        %v242 = vld [vmem:[%s131 + $0x2d8] sm:$0xff]
        %v243 = vld [vmem:[%s131 + $0x2e0] sm:$0xff]
        %v244 = vld [vmem:[%s131 + $0x2e8] sm:$0xff]
        %v245 = vld [vmem:[%s131 + $0x2f0] sm:$0xff]
        %v246 = vld [vmem:[%s131 + $0x2f8] sm:$0xff]
        %v247 = vld [vmem:[%s131 + $0x300] sm:$0xff]
        %v248 = vld [vmem:[%s131 + $0x308] sm:$0xff]
        %v249 = vld [vmem:[%s131 + $0x310] sm:$0xff]
        %v250 = vld [vmem:[%s131 + $0x318] sm:$0xff]
        %v251 = vld [vmem:[%s131 + $0x320] sm:$0xff]
        %v252 = vld [vmem:[%s131 + $0x328] sm:$0xff]
        %v253 = vld [vmem:[%s131 + $0x330] sm:$0xff]
        %v254 = vld [vmem:[%s131 + $0x338] sm:$0xff]
        %v255 = vld [vmem:[%s131 + $0x340] sm:$0xff]
        %v256 = vld [vmem:[%s131 + $0x348] sm:$0xff]
        %v257 = vld [vmem:[%s131 + $0x350] sm:$0xff]
        %v258 = vld [vmem:[%s131 + $0x358] sm:$0xff]
        %v259 = vld [vmem:[%s131 + $0x360] sm:$0xff]
        %v260 = vld [vmem:[%s131 + $0x368] sm:$0xff]
        %v261 = vld [vmem:[%s131 + $0x370] sm:$0xff]
        %v262 = vld [vmem:[%s131 + $0x378] sm:$0xff]
        %v263 = vld [vmem:[%s131 + $0x380] sm:$0xff]
        %v264 = vld [vmem:[%s131 + $0x388] sm:$0xff]
        %v265 = vld [vmem:[%s131 + $0x390] sm:$0xff]
        %v266 = vld [vmem:[%s131 + $0x398] sm:$0xff]
        %v267 = vld [vmem:[%s131 + $0x3a0] sm:$0xff]
        %v268 = vld [vmem:[%s131 + $0x3a8] sm:$0xff]
        %v269 = vld [vmem:[%s131 + $0x3b0] sm:$0xff]
        %v270 = vld [vmem:[%s131 + $0x3b8] sm:$0xff]
        %v271 = vld [vmem:[%s131 + $0x3c0] sm:$0xff]
        %v272 = vld [vmem:[%s131 + $0x3c8] sm:$0xff]
        %v273 = vld [vmem:[%s131 + $0x3d0] sm:$0xff]
        %v274 = vld [vmem:[%s131 + $0x3d8] sm:$0xff]
        %v275 = vld [vmem:[%s131 + $0x3e0] sm:$0xff]
        %v276 = vld [vmem:[%s131 + $0x3e8] sm:$0xff]
        %v277 = vld [vmem:[%s131 + $0x3f0] sm:$0xff]
        %v278 = vld [vmem:[%s131 + $0x3f8] sm:$0xff]
        %v279 = vld [vmem:[%s131 + $0x400] sm:$0xff]
        %v280 = vld [vmem:[%s131 + $0x408] sm:$0xff]
        %v281 = vld [vmem:[%s131 + $0x410] sm:$0xff]
        %v282 = vld [vmem:[%s131 + $0x418] sm:$0xff]
        %v283 = vld [vmem:[%s131 + $0x420] sm:$0xff]
        %v284 = vld [vmem:[%s131 + $0x428] sm:$0xff]
        %v285 = vld [vmem:[%s131 + $0x430] sm:$0xff]
        %v286 = vld [vmem:[%s131 + $0x438] sm:$0xff]
        %v287 = vld [vmem:[%s131 + $0x440] sm:$0xff]
        %v288 = vld [vmem:[%s131 + $0x448] sm:$0xff]
        %v289 = vld [vmem:[%s131 + $0x450] sm:$0xff]
        %v290 = vld [vmem:[%s131 + $0x458] sm:$0xff]
        %v291 = vld [vmem:[%s131 + $0x460] sm:$0xff]
        %v292 = vld [vmem:[%s131 + $0x468] sm:$0xff]
        %v293 = vld [vmem:[%s131 + $0x470] sm:$0xff]
        %v294 = vld [vmem:[%s131 + $0x478] sm:$0xff]
        %v295 = vld [vmem:[%s131 + $0x480] sm:$0xff]
        %v296 = vld [vmem:[%s131 + $0x488] sm:$0xff]
        %v297 = vld [vmem:[%s131 + $0x490] sm:$0xff]
        %v298 = vld [vmem:[%s131 + $0x498] sm:$0xff]
        %v299 = vld [vmem:[%s131 + $0x4a0] sm:$0xff]
        %v300 = vld [vmem:[%s131 + $0x4a8] sm:$0xff]
        %v301 = vld [vmem:[%s131 + $0x4b0] sm:$0xff]
        %v302 = vld [vmem:[%s131 + $0x4b8] sm:$0xff]
        %v303 = vld [vmem:[%s131 + $0x4c0] sm:$0xff]
        %v304 = vld [vmem:[%s131 + $0x4c8] sm:$0xff]
        %v305 = vld [vmem:[%s131 + $0x4d0] sm:$0xff]
        %v306 = vld [vmem:[%s131 + $0x4d8] sm:$0xff]
        %v307 = vld [vmem:[%s131 + $0x4e0] sm:$0xff]
        %v308 = vld [vmem:[%s131 + $0x4e8] sm:$0xff]
        %v309 = vld [vmem:[%s131 + $0x4f0] sm:$0xff]
        %v310 = vld [vmem:[%s131 + $0x4f8] sm:$0xff]
        %v311 = vld [vmem:[%s131 + $0x500] sm:$0xff]
        %v312 = vld [vmem:[%s131 + $0x508] sm:$0xff]
        %v313 = vld [vmem:[%s131 + $0x510] sm:$0xff]
        %v314 = vld [vmem:[%s131 + $0x518] sm:$0xff]
        %v315 = vld [vmem:[%s131 + $0x520] sm:$0xff]
        %v316 = vld [vmem:[%s131 + $0x528] sm:$0xff]
        %v317 = vld [vmem:[%s131 + $0x530] sm:$0xff]
        %v318 = vld [vmem:[%s131 + $0x538] sm:$0xff]
        %v319 = vld [vmem:[%s131 + $0x540] sm:$0xff]
        %v320 = vld [vmem:[%s131 + $0x548] sm:$0xff]
        %v321 = vld [vmem:[%s131 + $0x550] sm:$0xff]
        %v322 = vld [vmem:[%s131 + $0x558] sm:$0xff]
        %v323 = vld [vmem:[%s131 + $0x560] sm:$0xff]
        %v324 = vld [vmem:[%s131 + $0x568] sm:$0xff]
        %v325 = vld [vmem:[%s131 + $0x570] sm:$0xff]
        %v326 = vld [vmem:[%s131 + $0x578] sm:$0xff]
        %v327 = vld [vmem:[%s131 + $0x580] sm:$0xff]
        %v328 = vld [vmem:[%s131 + $0x588] sm:$0xff]
        %v329 = vld [vmem:[%s131 + $0x590] sm:$0xff]
        %v330 = vld [vmem:[%s131 + $0x598] sm:$0xff]
        %v331 = vld [vmem:[%s131 + $0x5a0] sm:$0xff]
        %v332 = vld [vmem:[%s131 + $0x5a8] sm:$0xff]
        %v333 = vld [vmem:[%s131 + $0x5b0] sm:$0xff]
        %v334 = vld [vmem:[%s131 + $0x5b8] sm:$0xff]
        %v335 = vld [vmem:[%s131 + $0x5c0] sm:$0xff]
        %v336 = vld [vmem:[%s131 + $0x5c8] sm:$0xff]
        %v337 = vld [vmem:[%s131 + $0x5d0] sm:$0xff]
        %v338 = vld [vmem:[%s131 + $0x5d8] sm:$0xff]
        %v339 = vld [vmem:[%s131 + $0x5e0] sm:$0xff]
        %v340 = vld [vmem:[%s131 + $0x5e8] sm:$0xff]
        %v341 = vld [vmem:[%s131 + $0x5f0] sm:$0xff]
        %v342 = vld [vmem:[%s131 + $0x5f8] sm:$0xff]
        %v343 = vld [vmem:[%s131 + $0x600] sm:$0xff]
        %v344 = vld [vmem:[%s131 + $0x608] sm:$0xff]
        %v345 = vld [vmem:[%s131 + $0x610] sm:$0xff]
        %v346 = vld [vmem:[%s131 + $0x618] sm:$0xff]
        %v347 = vld [vmem:[%s131 + $0x620] sm:$0xff]
        %v348 = vld [vmem:[%s131 + $0x628] sm:$0xff]
        %v349 = vld [vmem:[%s131 + $0x630] sm:$0xff]
        %v350 = vld [vmem:[%s131 + $0x638] sm:$0xff]
        %v351 = vld [vmem:[%s131 + $0x640] sm:$0xff]
        %v352 = vld [vmem:[%s131 + $0x648] sm:$0xff]
        %v353 = vld [vmem:[%s131 + $0x650] sm:$0xff]
        %v354 = vld [vmem:[%s131 + $0x658] sm:$0xff]
        %v355 = vld [vmem:[%s131 + $0x660] sm:$0xff]
        %v356 = vld [vmem:[%s131 + $0x668] sm:$0xff]
        %v357 = vld [vmem:[%s131 + $0x670] sm:$0xff]
        %v358 = vld [vmem:[%s131 + $0x678] sm:$0xff]
        %v359 = vld [vmem:[%s131 + $0x680] sm:$0xff]
        %v360 = vld [vmem:[%s131 + $0x688] sm:$0xff]
        %v361 = vld [vmem:[%s131 + $0x690] sm:$0xff]
        %v362 = vld [vmem:[%s131 + $0x698] sm:$0xff]
        %v363 = vld [vmem:[%s131 + $0x6a0] sm:$0xff]
        %v364 = vld [vmem:[%s131 + $0x6a8] sm:$0xff]
        %v365 = vld [vmem:[%s131 + $0x6b0] sm:$0xff]
        %v366 = vld [vmem:[%s131 + $0x6b8] sm:$0xff]
        %v367 = vld [vmem:[%s131 + $0x6c0] sm:$0xff]
        %v368 = vld [vmem:[%s131 + $0x6c8] sm:$0xff]
        %v369 = vld [vmem:[%s131 + $0x6d0] sm:$0xff]
        %v370 = vld [vmem:[%s131 + $0x6d8] sm:$0xff]
        %v371 = vld [vmem:[%s131 + $0x6e0] sm:$0xff]
        %v372 = vld [vmem:[%s131 + $0x6e8] sm:$0xff]
        %v373 = vld [vmem:[%s131 + $0x6f0] sm:$0xff]
        %v374 = vld [vmem:[%s131 + $0x6f8] sm:$0xff]
        %v375 = vld [vmem:[%s131 + $0x700] sm:$0xff]
        %v376 = vld [vmem:[%s131 + $0x708] sm:$0xff]
        %v377 = vld [vmem:[%s131 + $0x710] sm:$0xff]
        %v378 = vld [vmem:[%s131 + $0x718] sm:$0xff]
        %v379 = vld [vmem:[%s131 + $0x720] sm:$0xff]
        %v380 = vld [vmem:[%s131 + $0x728] sm:$0xff]
        %v381 = vld [vmem:[%s131 + $0x730] sm:$0xff]
        %v382 = vld [vmem:[%s131 + $0x738] sm:$0xff]
        %v383 = vld [vmem:[%s131 + $0x740] sm:$0xff]
        %v384 = vld [vmem:[%s131 + $0x748] sm:$0xff]
        %v385 = vld [vmem:[%s131 + $0x750] sm:$0xff]
        %v386 = vld [vmem:[%s131 + $0x758] sm:$0xff]
        %v387 = vld [vmem:[%s131 + $0x760] sm:$0xff]
        %v388 = vld [vmem:[%s131 + $0x768] sm:$0xff]
        %v389 = vld [vmem:[%s131 + $0x770] sm:$0xff]
        %v390 = vld [vmem:[%s131 + $0x778] sm:$0xff]
        %v391 = vld [vmem:[%s131 + $0x780] sm:$0xff]
        %v392 = vld [vmem:[%s131 + $0x788] sm:$0xff]
        %v393 = vld [vmem:[%s131 + $0x790] sm:$0xff]
        %v394 = vld [vmem:[%s131 + $0x798] sm:$0xff]
        %v395 = vld [vmem:[%s131 + $0x7a0] sm:$0xff]
        %v396 = vld [vmem:[%s131 + $0x7a8] sm:$0xff]
        %v397 = vld [vmem:[%s131 + $0x7b0] sm:$0xff]
        %v398 = vld [vmem:[%s131 + $0x7b8] sm:$0xff]
        %v399 = vld [vmem:[%s131 + $0x7c0] sm:$0xff]
        %v400 = vld [vmem:[%s131 + $0x7c8] sm:$0xff]
        %v401 = vld [vmem:[%s131 + $0x7d0] sm:$0xff]
        %v402 = vld [vmem:[%s131 + $0x7d8] sm:$0xff]
        %v403 = vld [vmem:[%s131 + $0x7e0] sm:$0xff]
        %v404 = vld [vmem:[%s131 + $0x7e8] sm:$0xff]
        %v405 = vld [vmem:[%s131 + $0x7f0] sm:$0xff]
        %v406 = vld [vmem:[%s131 + $0x7f8] sm:$0xff]
        %v407 = vunpack.c.l.bf16 %v151
        %v408 = vunpack.c.h.bf16 %v151
        %v409 = vunpack.c.l.bf16 %v152
        %v410 = vunpack.c.h.bf16 %v152
        %v411 = vunpack.c.l.bf16 %v153
        %v412 = vunpack.c.h.bf16 %v153
        %v413 = vunpack.c.l.bf16 %v154
        %v414 = vunpack.c.h.bf16 %v154
        %v415 = vunpack.c.l.bf16 %v155
        %v416 = vunpack.c.h.bf16 %v155
        %v417 = vunpack.c.l.bf16 %v156
        %v418 = vunpack.c.h.bf16 %v156
        %v419 = vunpack.c.l.bf16 %v157
        %v420 = vunpack.c.h.bf16 %v157
        %v421 = vunpack.c.l.bf16 %v158
        %v422 = vunpack.c.h.bf16 %v158
        %v423 = vunpack.c.l.bf16 %v159
        %v424 = vunpack.c.h.bf16 %v159
        %v425 = vunpack.c.l.bf16 %v160
        %v426 = vunpack.c.h.bf16 %v160
        %v427 = vunpack.c.l.bf16 %v161
        %v428 = vunpack.c.h.bf16 %v161
        %v429 = vunpack.c.l.bf16 %v162
        %v430 = vunpack.c.h.bf16 %v162
        %v431 = vunpack.c.l.bf16 %v163
        %v432 = vunpack.c.h.bf16 %v163
        %v433 = vunpack.c.l.bf16 %v164
        %v434 = vunpack.c.h.bf16 %v164
        %v435 = vunpack.c.l.bf16 %v165
        %v436 = vunpack.c.h.bf16 %v165
        %v437 = vunpack.c.l.bf16 %v166
        %v438 = vunpack.c.h.bf16 %v166
        %v439 = vunpack.c.l.bf16 %v167
        %v440 = vunpack.c.h.bf16 %v167
        %v441 = vunpack.c.l.bf16 %v168
        %v442 = vunpack.c.h.bf16 %v168
        %v443 = vunpack.c.l.bf16 %v169
        %v444 = vunpack.c.h.bf16 %v169
        %v445 = vunpack.c.l.bf16 %v170
        %v446 = vunpack.c.h.bf16 %v170
        %v447 = vunpack.c.l.bf16 %v171
        %v448 = vunpack.c.h.bf16 %v171
        %v449 = vunpack.c.l.bf16 %v172
        %v450 = vunpack.c.h.bf16 %v172
        %v451 = vunpack.c.l.bf16 %v173
        %v452 = vunpack.c.h.bf16 %v173
        %v453 = vunpack.c.l.bf16 %v174
        %v454 = vunpack.c.h.bf16 %v174
        %v455 = vunpack.c.l.bf16 %v175
        %v456 = vunpack.c.h.bf16 %v175
        %v457 = vunpack.c.l.bf16 %v176
        %v458 = vunpack.c.h.bf16 %v176
        %v459 = vunpack.c.l.bf16 %v177
        %v460 = vunpack.c.h.bf16 %v177
        %v461 = vunpack.c.l.bf16 %v178
        %v462 = vunpack.c.h.bf16 %v178
        %v463 = vunpack.c.l.bf16 %v179
        %v464 = vunpack.c.h.bf16 %v179
        %v465 = vunpack.c.l.bf16 %v180
        %v466 = vunpack.c.h.bf16 %v180
        %v467 = vunpack.c.l.bf16 %v181
        %v468 = vunpack.c.h.bf16 %v181
        %v469 = vunpack.c.l.bf16 %v182
        %v470 = vunpack.c.h.bf16 %v182
        %v471 = vunpack.c.l.bf16 %v183
        %v472 = vunpack.c.h.bf16 %v183
        %v473 = vunpack.c.l.bf16 %v184
        %v474 = vunpack.c.h.bf16 %v184
        %v475 = vunpack.c.l.bf16 %v185
        %v476 = vunpack.c.h.bf16 %v185
        %v477 = vunpack.c.l.bf16 %v186
        %v478 = vunpack.c.h.bf16 %v186
        %v479 = vunpack.c.l.bf16 %v187
        %v480 = vunpack.c.h.bf16 %v187
        %v481 = vunpack.c.l.bf16 %v188
        %v482 = vunpack.c.h.bf16 %v188
        %v483 = vunpack.c.l.bf16 %v189
        %v484 = vunpack.c.h.bf16 %v189
        %v485 = vunpack.c.l.bf16 %v190
        %v486 = vunpack.c.h.bf16 %v190
        %v487 = vunpack.c.l.bf16 %v191
        %v488 = vunpack.c.h.bf16 %v191
        %v489 = vunpack.c.l.bf16 %v192
        %v490 = vunpack.c.h.bf16 %v192
        %v491 = vunpack.c.l.bf16 %v193
        %v492 = vunpack.c.h.bf16 %v193
        %v493 = vunpack.c.l.bf16 %v194
        %v494 = vunpack.c.h.bf16 %v194
        %v495 = vunpack.c.l.bf16 %v195
        %v496 = vunpack.c.h.bf16 %v195
        %v497 = vunpack.c.l.bf16 %v196
        %v498 = vunpack.c.h.bf16 %v196
        %v499 = vunpack.c.l.bf16 %v197
        %v500 = vunpack.c.h.bf16 %v197
        %v501 = vunpack.c.l.bf16 %v198
        %v502 = vunpack.c.h.bf16 %v198
        %v503 = vunpack.c.l.bf16 %v199
        %v504 = vunpack.c.h.bf16 %v199
        %v505 = vunpack.c.l.bf16 %v200
        %v506 = vunpack.c.h.bf16 %v200
        %v507 = vunpack.c.l.bf16 %v201
        %v508 = vunpack.c.h.bf16 %v201
        %v509 = vunpack.c.l.bf16 %v202
        %v510 = vunpack.c.h.bf16 %v202
        %v511 = vunpack.c.l.bf16 %v203
        %v512 = vunpack.c.h.bf16 %v203
        %v513 = vunpack.c.l.bf16 %v204
        %v514 = vunpack.c.h.bf16 %v204
        %v515 = vunpack.c.l.bf16 %v205
        %v516 = vunpack.c.h.bf16 %v205
        %v517 = vunpack.c.l.bf16 %v206
        %v518 = vunpack.c.h.bf16 %v206
        %v519 = vunpack.c.l.bf16 %v207
        %v520 = vunpack.c.h.bf16 %v207
        %v521 = vunpack.c.l.bf16 %v208
        %v522 = vunpack.c.h.bf16 %v208
        %v523 = vunpack.c.l.bf16 %v209
        %v524 = vunpack.c.h.bf16 %v209
        %v525 = vunpack.c.l.bf16 %v210
        %v526 = vunpack.c.h.bf16 %v210
        %v527 = vunpack.c.l.bf16 %v211
        %v528 = vunpack.c.h.bf16 %v211
        %v529 = vunpack.c.l.bf16 %v212
        %v530 = vunpack.c.h.bf16 %v212
        %v531 = vunpack.c.l.bf16 %v213
        %v532 = vunpack.c.h.bf16 %v213
        %v533 = vunpack.c.l.bf16 %v214
        %v534 = vunpack.c.h.bf16 %v214
        %v535 = vunpack.c.l.bf16 %v215
        %v536 = vunpack.c.h.bf16 %v215
        %v537 = vunpack.c.l.bf16 %v216
        %v538 = vunpack.c.h.bf16 %v216
        %v539 = vunpack.c.l.bf16 %v217
        %v540 = vunpack.c.h.bf16 %v217
        %v541 = vunpack.c.l.bf16 %v218
        %v542 = vunpack.c.h.bf16 %v218
        %v543 = vunpack.c.l.bf16 %v219
        %v544 = vunpack.c.h.bf16 %v219
        %v545 = vunpack.c.l.bf16 %v220
        %v546 = vunpack.c.h.bf16 %v220
        %v547 = vunpack.c.l.bf16 %v221
        %v548 = vunpack.c.h.bf16 %v221
        %v549 = vunpack.c.l.bf16 %v222
        %v550 = vunpack.c.h.bf16 %v222
        %v551 = vunpack.c.l.bf16 %v223
        %v552 = vunpack.c.h.bf16 %v223
        %v553 = vunpack.c.l.bf16 %v224
        %v554 = vunpack.c.h.bf16 %v224
        %v555 = vunpack.c.l.bf16 %v225
        %v556 = vunpack.c.h.bf16 %v225
        %v557 = vunpack.c.l.bf16 %v226
        %v558 = vunpack.c.h.bf16 %v226
        %v559 = vunpack.c.l.bf16 %v227
        %v560 = vunpack.c.h.bf16 %v227
        %v561 = vunpack.c.l.bf16 %v228
        %v562 = vunpack.c.h.bf16 %v228
        %v563 = vunpack.c.l.bf16 %v229
        %v564 = vunpack.c.h.bf16 %v229
        %v565 = vunpack.c.l.bf16 %v230
        %v566 = vunpack.c.h.bf16 %v230
        %v567 = vunpack.c.l.bf16 %v231
        %v568 = vunpack.c.h.bf16 %v231
        %v569 = vunpack.c.l.bf16 %v232
        %v570 = vunpack.c.h.bf16 %v232
        %v571 = vunpack.c.l.bf16 %v233
        %v572 = vunpack.c.h.bf16 %v233
        %v573 = vunpack.c.l.bf16 %v234
        %v574 = vunpack.c.h.bf16 %v234
        %v575 = vunpack.c.l.bf16 %v235
        %v576 = vunpack.c.h.bf16 %v235
        %v577 = vunpack.c.l.bf16 %v236
        %v578 = vunpack.c.h.bf16 %v236
        %v579 = vunpack.c.l.bf16 %v237
        %v580 = vunpack.c.h.bf16 %v237
        %v581 = vunpack.c.l.bf16 %v238
        %v582 = vunpack.c.h.bf16 %v238
        %v583 = vunpack.c.l.bf16 %v239
        %v584 = vunpack.c.h.bf16 %v239
        %v585 = vunpack.c.l.bf16 %v240
        %v586 = vunpack.c.h.bf16 %v240
        %v587 = vunpack.c.l.bf16 %v241
        %v588 = vunpack.c.h.bf16 %v241
        %v589 = vunpack.c.l.bf16 %v242
        %v590 = vunpack.c.h.bf16 %v242
        %v591 = vunpack.c.l.bf16 %v243
        %v592 = vunpack.c.h.bf16 %v243
        %v593 = vunpack.c.l.bf16 %v244
        %v594 = vunpack.c.h.bf16 %v244
        %v595 = vunpack.c.l.bf16 %v245
        %v596 = vunpack.c.h.bf16 %v245
        %v597 = vunpack.c.l.bf16 %v246
        %v598 = vunpack.c.h.bf16 %v246
        %v599 = vunpack.c.l.bf16 %v247
        %v600 = vunpack.c.h.bf16 %v247
        %v601 = vunpack.c.l.bf16 %v248
        %v602 = vunpack.c.h.bf16 %v248
        %v603 = vunpack.c.l.bf16 %v249
        %v604 = vunpack.c.h.bf16 %v249
        %v605 = vunpack.c.l.bf16 %v250
        %v606 = vunpack.c.h.bf16 %v250
        %v607 = vunpack.c.l.bf16 %v251
        %v608 = vunpack.c.h.bf16 %v251
        %v609 = vunpack.c.l.bf16 %v252
        %v610 = vunpack.c.h.bf16 %v252
        %v611 = vunpack.c.l.bf16 %v253
        %v612 = vunpack.c.h.bf16 %v253
        %v613 = vunpack.c.l.bf16 %v254
        %v614 = vunpack.c.h.bf16 %v254
        %v615 = vunpack.c.l.bf16 %v255
        %v616 = vunpack.c.h.bf16 %v255
        %v617 = vunpack.c.l.bf16 %v256
        %v618 = vunpack.c.h.bf16 %v256
        %v619 = vunpack.c.l.bf16 %v257
        %v620 = vunpack.c.h.bf16 %v257
        %v621 = vunpack.c.l.bf16 %v258
        %v622 = vunpack.c.h.bf16 %v258
        %v623 = vunpack.c.l.bf16 %v259
        %v624 = vunpack.c.h.bf16 %v259
        %v625 = vunpack.c.l.bf16 %v260
        %v626 = vunpack.c.h.bf16 %v260
        %v627 = vunpack.c.l.bf16 %v261
        %v628 = vunpack.c.h.bf16 %v261
        %v629 = vunpack.c.l.bf16 %v262
        %v630 = vunpack.c.h.bf16 %v262
        %v631 = vunpack.c.l.bf16 %v263
        %v632 = vunpack.c.h.bf16 %v263
        %v633 = vunpack.c.l.bf16 %v264
        %v634 = vunpack.c.h.bf16 %v264
        %v635 = vunpack.c.l.bf16 %v265
        %v636 = vunpack.c.h.bf16 %v265
        %v637 = vunpack.c.l.bf16 %v266
        %v638 = vunpack.c.h.bf16 %v266
        %v639 = vunpack.c.l.bf16 %v267
        %v640 = vunpack.c.h.bf16 %v267
        %v641 = vunpack.c.l.bf16 %v268
        %v642 = vunpack.c.h.bf16 %v268
        %v643 = vunpack.c.l.bf16 %v269
        %v644 = vunpack.c.h.bf16 %v269
        %v645 = vunpack.c.l.bf16 %v270
        %v646 = vunpack.c.h.bf16 %v270
        %v647 = vunpack.c.l.bf16 %v271
        %v648 = vunpack.c.h.bf16 %v271
        %v649 = vunpack.c.l.bf16 %v272
        %v650 = vunpack.c.h.bf16 %v272
        %v651 = vunpack.c.l.bf16 %v273
        %v652 = vunpack.c.h.bf16 %v273
        %v653 = vunpack.c.l.bf16 %v274
        %v654 = vunpack.c.h.bf16 %v274
        %v655 = vunpack.c.l.bf16 %v275
        %v656 = vunpack.c.h.bf16 %v275
        %v657 = vunpack.c.l.bf16 %v276
        %v658 = vunpack.c.h.bf16 %v276
        %v659 = vunpack.c.l.bf16 %v277
        %v660 = vunpack.c.h.bf16 %v277
        %v661 = vunpack.c.l.bf16 %v278
        %v662 = vunpack.c.h.bf16 %v278
        %v663 = vunpack.c.l.bf16 %v279
        %v664 = vunpack.c.h.bf16 %v279
        %v665 = vunpack.c.l.bf16 %v280
        %v666 = vunpack.c.h.bf16 %v280
        %v667 = vunpack.c.l.bf16 %v281
        %v668 = vunpack.c.h.bf16 %v281
        %v669 = vunpack.c.l.bf16 %v282
        %v670 = vunpack.c.h.bf16 %v282
        %v671 = vunpack.c.l.bf16 %v283
        %v672 = vunpack.c.h.bf16 %v283
        %v673 = vunpack.c.l.bf16 %v284
        %v674 = vunpack.c.h.bf16 %v284
        %v675 = vunpack.c.l.bf16 %v285
        %v676 = vunpack.c.h.bf16 %v285
        %v677 = vunpack.c.l.bf16 %v286
        %v678 = vunpack.c.h.bf16 %v286
        %v679 = vunpack.c.l.bf16 %v287
        %v680 = vunpack.c.h.bf16 %v287
        %v681 = vunpack.c.l.bf16 %v288
        %v682 = vunpack.c.h.bf16 %v288
        %v683 = vunpack.c.l.bf16 %v289
        %v684 = vunpack.c.h.bf16 %v289
        %v685 = vunpack.c.l.bf16 %v290
        %v686 = vunpack.c.h.bf16 %v290
        %v687 = vunpack.c.l.bf16 %v291
        %v688 = vunpack.c.h.bf16 %v291
        %v689 = vunpack.c.l.bf16 %v292
        %v690 = vunpack.c.h.bf16 %v292
        %v691 = vunpack.c.l.bf16 %v293
        %v692 = vunpack.c.h.bf16 %v293
        %v693 = vunpack.c.l.bf16 %v294
        %v694 = vunpack.c.h.bf16 %v294
        %v695 = vunpack.c.l.bf16 %v295
        %v696 = vunpack.c.h.bf16 %v295
        %v697 = vunpack.c.l.bf16 %v296
        %v698 = vunpack.c.h.bf16 %v296
        %v699 = vunpack.c.l.bf16 %v297
        %v700 = vunpack.c.h.bf16 %v297
        %v701 = vunpack.c.l.bf16 %v298
        %v702 = vunpack.c.h.bf16 %v298
        %v703 = vunpack.c.l.bf16 %v299
        %v704 = vunpack.c.h.bf16 %v299
        %v705 = vunpack.c.l.bf16 %v300
        %v706 = vunpack.c.h.bf16 %v300
        %v707 = vunpack.c.l.bf16 %v301
        %v708 = vunpack.c.h.bf16 %v301
        %v709 = vunpack.c.l.bf16 %v302
        %v710 = vunpack.c.h.bf16 %v302
        %v711 = vunpack.c.l.bf16 %v303
        %v712 = vunpack.c.h.bf16 %v303
        %v713 = vunpack.c.l.bf16 %v304
        %v714 = vunpack.c.h.bf16 %v304
        %v715 = vunpack.c.l.bf16 %v305
        %v716 = vunpack.c.h.bf16 %v305
        %v717 = vunpack.c.l.bf16 %v306
        %v718 = vunpack.c.h.bf16 %v306
        %v719 = vunpack.c.l.bf16 %v307
        %v720 = vunpack.c.h.bf16 %v307
        %v721 = vunpack.c.l.bf16 %v308
        %v722 = vunpack.c.h.bf16 %v308
        %v723 = vunpack.c.l.bf16 %v309
        %v724 = vunpack.c.h.bf16 %v309
        %v725 = vunpack.c.l.bf16 %v310
        %v726 = vunpack.c.h.bf16 %v310
        %v727 = vunpack.c.l.bf16 %v311
        %v728 = vunpack.c.h.bf16 %v311
        %v729 = vunpack.c.l.bf16 %v312
        %v730 = vunpack.c.h.bf16 %v312
        %v731 = vunpack.c.l.bf16 %v313
        %v732 = vunpack.c.h.bf16 %v313
        %v733 = vunpack.c.l.bf16 %v314
        %v734 = vunpack.c.h.bf16 %v314
        %v735 = vunpack.c.l.bf16 %v315
        %v736 = vunpack.c.h.bf16 %v315
        %v737 = vunpack.c.l.bf16 %v316
        %v738 = vunpack.c.h.bf16 %v316
        %v739 = vunpack.c.l.bf16 %v317
        %v740 = vunpack.c.h.bf16 %v317
        %v741 = vunpack.c.l.bf16 %v318
        %v742 = vunpack.c.h.bf16 %v318
        %v743 = vunpack.c.l.bf16 %v319
        %v744 = vunpack.c.h.bf16 %v319
        %v745 = vunpack.c.l.bf16 %v320
        %v746 = vunpack.c.h.bf16 %v320
        %v747 = vunpack.c.l.bf16 %v321
        %v748 = vunpack.c.h.bf16 %v321
        %v749 = vunpack.c.l.bf16 %v322
        %v750 = vunpack.c.h.bf16 %v322
        %v751 = vunpack.c.l.bf16 %v323
        %v752 = vunpack.c.h.bf16 %v323
        %v753 = vunpack.c.l.bf16 %v324
        %v754 = vunpack.c.h.bf16 %v324
        %v755 = vunpack.c.l.bf16 %v325
        %v756 = vunpack.c.h.bf16 %v325
        %v757 = vunpack.c.l.bf16 %v326
        %v758 = vunpack.c.h.bf16 %v326
        %v759 = vunpack.c.l.bf16 %v327
        %v760 = vunpack.c.h.bf16 %v327
        %v761 = vunpack.c.l.bf16 %v328
        %v762 = vunpack.c.h.bf16 %v328
        %v763 = vunpack.c.l.bf16 %v329
        %v764 = vunpack.c.h.bf16 %v329
        %v765 = vunpack.c.l.bf16 %v330
        %v766 = vunpack.c.h.bf16 %v330
        %v767 = vunpack.c.l.bf16 %v331
        %v768 = vunpack.c.h.bf16 %v331
        %v769 = vunpack.c.l.bf16 %v332
        %v770 = vunpack.c.h.bf16 %v332
        %v771 = vunpack.c.l.bf16 %v333
        %v772 = vunpack.c.h.bf16 %v333
        %v773 = vunpack.c.l.bf16 %v334
        %v774 = vunpack.c.h.bf16 %v334
        %v775 = vunpack.c.l.bf16 %v335
        %v776 = vunpack.c.h.bf16 %v335
        %v777 = vunpack.c.l.bf16 %v336
        %v778 = vunpack.c.h.bf16 %v336
        %v779 = vunpack.c.l.bf16 %v337
        %v780 = vunpack.c.h.bf16 %v337
        %v781 = vunpack.c.l.bf16 %v338
        %v782 = vunpack.c.h.bf16 %v338
        %v783 = vunpack.c.l.bf16 %v339
        %v784 = vunpack.c.h.bf16 %v339
        %v785 = vunpack.c.l.bf16 %v340
        %v786 = vunpack.c.h.bf16 %v340
        %v787 = vunpack.c.l.bf16 %v341
        %v788 = vunpack.c.h.bf16 %v341
        %v789 = vunpack.c.l.bf16 %v342
        %v790 = vunpack.c.h.bf16 %v342
        %v791 = vunpack.c.l.bf16 %v343
        %v792 = vunpack.c.h.bf16 %v343
        %v793 = vunpack.c.l.bf16 %v344
        %v794 = vunpack.c.h.bf16 %v344
        %v795 = vunpack.c.l.bf16 %v345
        %v796 = vunpack.c.h.bf16 %v345
        %v797 = vunpack.c.l.bf16 %v346
        %v798 = vunpack.c.h.bf16 %v346
        %v799 = vunpack.c.l.bf16 %v347
        %v800 = vunpack.c.h.bf16 %v347
        %v801 = vunpack.c.l.bf16 %v348
        %v802 = vunpack.c.h.bf16 %v348
        %v803 = vunpack.c.l.bf16 %v349
        %v804 = vunpack.c.h.bf16 %v349
        %v805 = vunpack.c.l.bf16 %v350
        %v806 = vunpack.c.h.bf16 %v350
        %v807 = vunpack.c.l.bf16 %v351
        %v808 = vunpack.c.h.bf16 %v351
        %v809 = vunpack.c.l.bf16 %v352
        %v810 = vunpack.c.h.bf16 %v352
        %v811 = vunpack.c.l.bf16 %v353
        %v812 = vunpack.c.h.bf16 %v353
        %v813 = vunpack.c.l.bf16 %v354
        %v814 = vunpack.c.h.bf16 %v354
        %v815 = vunpack.c.l.bf16 %v355
        %v816 = vunpack.c.h.bf16 %v355
        %v817 = vunpack.c.l.bf16 %v356
        %v818 = vunpack.c.h.bf16 %v356
        %v819 = vunpack.c.l.bf16 %v357
        %v820 = vunpack.c.h.bf16 %v357
        %v821 = vunpack.c.l.bf16 %v358
        %v822 = vunpack.c.h.bf16 %v358
        %v823 = vunpack.c.l.bf16 %v359
        %v824 = vunpack.c.h.bf16 %v359
        %v825 = vunpack.c.l.bf16 %v360
        %v826 = vunpack.c.h.bf16 %v360
        %v827 = vunpack.c.l.bf16 %v361
        %v828 = vunpack.c.h.bf16 %v361
        %v829 = vunpack.c.l.bf16 %v362
        %v830 = vunpack.c.h.bf16 %v362
        %v831 = vunpack.c.l.bf16 %v363
        %v832 = vunpack.c.h.bf16 %v363
        %v833 = vunpack.c.l.bf16 %v364
        %v834 = vunpack.c.h.bf16 %v364
        %v835 = vunpack.c.l.bf16 %v365
        %v836 = vunpack.c.h.bf16 %v365
        %v837 = vunpack.c.l.bf16 %v366
        %v838 = vunpack.c.h.bf16 %v366
        %v839 = vunpack.c.l.bf16 %v367
        %v840 = vunpack.c.h.bf16 %v367
        %v841 = vunpack.c.l.bf16 %v368
        %v842 = vunpack.c.h.bf16 %v368
        %v843 = vunpack.c.l.bf16 %v369
        %v844 = vunpack.c.h.bf16 %v369
        %v845 = vunpack.c.l.bf16 %v370
        %v846 = vunpack.c.h.bf16 %v370
        %v847 = vunpack.c.l.bf16 %v371
        %v848 = vunpack.c.h.bf16 %v371
        %v849 = vunpack.c.l.bf16 %v372
        %v850 = vunpack.c.h.bf16 %v372
        %v851 = vunpack.c.l.bf16 %v373
        %v852 = vunpack.c.h.bf16 %v373
        %v853 = vunpack.c.l.bf16 %v374
        %v854 = vunpack.c.h.bf16 %v374
        %v855 = vunpack.c.l.bf16 %v375
        %v856 = vunpack.c.h.bf16 %v375
        %v857 = vunpack.c.l.bf16 %v376
        %v858 = vunpack.c.h.bf16 %v376
        %v859 = vunpack.c.l.bf16 %v377
        %v860 = vunpack.c.h.bf16 %v377
        %v861 = vunpack.c.l.bf16 %v378
        %v862 = vunpack.c.h.bf16 %v378
        %v863 = vunpack.c.l.bf16 %v379
        %v864 = vunpack.c.h.bf16 %v379
        %v865 = vunpack.c.l.bf16 %v380
        %v866 = vunpack.c.h.bf16 %v380
        %v867 = vunpack.c.l.bf16 %v381
        %v868 = vunpack.c.h.bf16 %v381
        %v869 = vunpack.c.l.bf16 %v382
        %v870 = vunpack.c.h.bf16 %v382
        %v871 = vunpack.c.l.bf16 %v383
        %v872 = vunpack.c.h.bf16 %v383
        %v873 = vunpack.c.l.bf16 %v384
        %v874 = vunpack.c.h.bf16 %v384
        %v875 = vunpack.c.l.bf16 %v385
        %v876 = vunpack.c.h.bf16 %v385
        %v877 = vunpack.c.l.bf16 %v386
        %v878 = vunpack.c.h.bf16 %v386
        %v879 = vunpack.c.l.bf16 %v387
        %v880 = vunpack.c.h.bf16 %v387
        %v881 = vunpack.c.l.bf16 %v388
        %v882 = vunpack.c.h.bf16 %v388
        %v883 = vunpack.c.l.bf16 %v389
        %v884 = vunpack.c.h.bf16 %v389
        %v885 = vunpack.c.l.bf16 %v390
        %v886 = vunpack.c.h.bf16 %v390
        %v887 = vunpack.c.l.bf16 %v391
        %v888 = vunpack.c.h.bf16 %v391
        %v889 = vunpack.c.l.bf16 %v392
        %v890 = vunpack.c.h.bf16 %v392
        %v891 = vunpack.c.l.bf16 %v393
        %v892 = vunpack.c.h.bf16 %v393
        %v893 = vunpack.c.l.bf16 %v394
        %v894 = vunpack.c.h.bf16 %v394
        %v895 = vunpack.c.l.bf16 %v395
        %v896 = vunpack.c.h.bf16 %v395
        %v897 = vunpack.c.l.bf16 %v396
        %v898 = vunpack.c.h.bf16 %v396
        %v899 = vunpack.c.l.bf16 %v397
        %v900 = vunpack.c.h.bf16 %v397
        %v901 = vunpack.c.l.bf16 %v398
        %v902 = vunpack.c.h.bf16 %v398
        %v903 = vunpack.c.l.bf16 %v399
        %v904 = vunpack.c.h.bf16 %v399
        %v905 = vunpack.c.l.bf16 %v400
        %v906 = vunpack.c.h.bf16 %v400
        %v907 = vunpack.c.l.bf16 %v401
        %v908 = vunpack.c.h.bf16 %v401
        %v909 = vunpack.c.l.bf16 %v402
        %v910 = vunpack.c.h.bf16 %v402
        %v911 = vunpack.c.l.bf16 %v403
        %v912 = vunpack.c.h.bf16 %v403
        %v913 = vunpack.c.l.bf16 %v404
        %v914 = vunpack.c.h.bf16 %v404
        %v915 = vunpack.c.l.bf16 %v405
        %v916 = vunpack.c.h.bf16 %v405
        %v917 = vunpack.c.l.bf16 %v406
        %v918 = vunpack.c.h.bf16 %v406
        %v919 = vadd.f32 %v407, %v409
        %v920 = vadd.f32 %v919, %v411
        %v921 = vadd.f32 %v920, %v413
        %v922 = vadd.f32 %v921, %v415
        %v923 = vadd.f32 %v922, %v417
        %v924 = vadd.f32 %v923, %v419
        %v925 = vadd.f32 %v924, %v421
        %v926 = vadd.f32 %v925, %v423
        %v927 = vadd.f32 %v926, %v425
        %v928 = vadd.f32 %v927, %v427
        %v929 = vadd.f32 %v928, %v429
        %v930 = vadd.f32 %v929, %v431
        %v931 = vadd.f32 %v930, %v433
        %v932 = vadd.f32 %v931, %v435
        %v933 = vadd.f32 %v932, %v437
        %v934 = vadd.f32 %v933, %v439
        %v935 = vadd.f32 %v934, %v441
        %v936 = vadd.f32 %v935, %v443
        %v937 = vadd.f32 %v936, %v445
        %v938 = vadd.f32 %v937, %v447
        %v939 = vadd.f32 %v938, %v449
        %v940 = vadd.f32 %v939, %v451
        %v941 = vadd.f32 %v940, %v453
        %v942 = vadd.f32 %v941, %v455
        %v943 = vadd.f32 %v942, %v457
        %v944 = vadd.f32 %v943, %v459
        %v945 = vadd.f32 %v944, %v461
        %v946 = vadd.f32 %v945, %v463
        %v947 = vadd.f32 %v946, %v465
        %v948 = vadd.f32 %v947, %v467
        %v949 = vadd.f32 %v948, %v469
        %v950 = vadd.f32 %v949, %v471
        %v951 = vadd.f32 %v950, %v473
        %v952 = vadd.f32 %v951, %v475
        %v953 = vadd.f32 %v952, %v477
        %v954 = vadd.f32 %v953, %v479
        %v955 = vadd.f32 %v954, %v481
        %v956 = vadd.f32 %v955, %v483
        %v957 = vadd.f32 %v956, %v485
        %v958 = vadd.f32 %v957, %v487
        %v959 = vadd.f32 %v958, %v489
        %v960 = vadd.f32 %v959, %v491
        %v961 = vadd.f32 %v960, %v493
        %v962 = vadd.f32 %v961, %v495
        %v963 = vadd.f32 %v962, %v497
        %v964 = vadd.f32 %v963, %v499
        %v965 = vadd.f32 %v964, %v501
        %v966 = vadd.f32 %v965, %v503
        %v967 = vadd.f32 %v966, %v505
        %v968 = vadd.f32 %v967, %v507
        %v969 = vadd.f32 %v968, %v509
        %v970 = vadd.f32 %v969, %v511
        %v971 = vadd.f32 %v970, %v513
        %v972 = vadd.f32 %v971, %v515
        %v973 = vadd.f32 %v972, %v517
        %v974 = vadd.f32 %v973, %v519
        %v975 = vadd.f32 %v974, %v521
        %v976 = vadd.f32 %v975, %v523
        %v977 = vadd.f32 %v976, %v525
        %v978 = vadd.f32 %v977, %v527
        %v979 = vadd.f32 %v978, %v529
        %v980 = vadd.f32 %v979, %v531
        %v981 = vadd.f32 %v980, %v533
        %v982 = vadd.f32 %v981, %v535
        %v983 = vadd.f32 %v982, %v537
        %v984 = vadd.f32 %v983, %v539
        %v985 = vadd.f32 %v984, %v541
        %v986 = vadd.f32 %v985, %v543
        %v987 = vadd.f32 %v986, %v545
        %v988 = vadd.f32 %v987, %v547
        %v989 = vadd.f32 %v988, %v549
        %v990 = vadd.f32 %v989, %v551
        %v991 = vadd.f32 %v990, %v553
        %v992 = vadd.f32 %v991, %v555
        %v993 = vadd.f32 %v992, %v557
        %v994 = vadd.f32 %v993, %v559
        %v995 = vadd.f32 %v994, %v561
        %v996 = vadd.f32 %v995, %v563
        %v997 = vadd.f32 %v996, %v565
        %v998 = vadd.f32 %v997, %v567
        %v999 = vadd.f32 %v998, %v569
        %v1000 = vadd.f32 %v999, %v571
        %v1001 = vadd.f32 %v1000, %v573
        %v1002 = vadd.f32 %v1001, %v575
        %v1003 = vadd.f32 %v1002, %v577
        %v1004 = vadd.f32 %v1003, %v579
        %v1005 = vadd.f32 %v1004, %v581
        %v1006 = vadd.f32 %v1005, %v583
        %v1007 = vadd.f32 %v1006, %v585
        %v1008 = vadd.f32 %v1007, %v587
        %v1009 = vadd.f32 %v1008, %v589
        %v1010 = vadd.f32 %v1009, %v591
        %v1011 = vadd.f32 %v1010, %v593
        %v1012 = vadd.f32 %v1011, %v595
        %v1013 = vadd.f32 %v1012, %v597
        %v1014 = vadd.f32 %v1013, %v599
        %v1015 = vadd.f32 %v1014, %v601
        %v1016 = vadd.f32 %v1015, %v603
        %v1017 = vadd.f32 %v1016, %v605
        %v1018 = vadd.f32 %v1017, %v607
        %v1019 = vadd.f32 %v1018, %v609
        %v1020 = vadd.f32 %v1019, %v611
        %v1021 = vadd.f32 %v1020, %v613
        %v1022 = vadd.f32 %v1021, %v615
        %v1023 = vadd.f32 %v1022, %v617
        %v1024 = vadd.f32 %v1023, %v619
        %v1025 = vadd.f32 %v1024, %v621
        %v1026 = vadd.f32 %v1025, %v623
        %v1027 = vadd.f32 %v1026, %v625
        %v1028 = vadd.f32 %v1027, %v627
        %v1029 = vadd.f32 %v1028, %v629
        %v1030 = vadd.f32 %v1029, %v631
        %v1031 = vadd.f32 %v1030, %v633
        %v1032 = vadd.f32 %v1031, %v635
        %v1033 = vadd.f32 %v1032, %v637
        %v1034 = vadd.f32 %v1033, %v639
        %v1035 = vadd.f32 %v1034, %v641
        %v1036 = vadd.f32 %v1035, %v643
        %v1037 = vadd.f32 %v1036, %v645
        %v1038 = vadd.f32 %v1037, %v647
        %v1039 = vadd.f32 %v1038, %v649
        %v1040 = vadd.f32 %v1039, %v651
        %v1041 = vadd.f32 %v1040, %v653
        %v1042 = vadd.f32 %v1041, %v655
        %v1043 = vadd.f32 %v1042, %v657
        %v1044 = vadd.f32 %v1043, %v659
        %v1045 = vadd.f32 %v1044, %v661
        %v1046 = vadd.f32 %v1045, %v663
        %v1047 = vadd.f32 %v1046, %v665
        %v1048 = vadd.f32 %v1047, %v667
        %v1049 = vadd.f32 %v1048, %v669
        %v1050 = vadd.f32 %v1049, %v671
        %v1051 = vadd.f32 %v1050, %v673
        %v1052 = vadd.f32 %v1051, %v675
        %v1053 = vadd.f32 %v1052, %v677
        %v1054 = vadd.f32 %v1053, %v679
        %v1055 = vadd.f32 %v1054, %v681
        %v1056 = vadd.f32 %v1055, %v683
        %v1057 = vadd.f32 %v1056, %v685
        %v1058 = vadd.f32 %v1057, %v687
        %v1059 = vadd.f32 %v1058, %v689
        %v1060 = vadd.f32 %v1059, %v691
        %v1061 = vadd.f32 %v1060, %v693
        %v1062 = vadd.f32 %v1061, %v695
        %v1063 = vadd.f32 %v1062, %v697
        %v1064 = vadd.f32 %v1063, %v699
        %v1065 = vadd.f32 %v1064, %v701
        %v1066 = vadd.f32 %v1065, %v703
        %v1067 = vadd.f32 %v1066, %v705
        %v1068 = vadd.f32 %v1067, %v707
        %v1069 = vadd.f32 %v1068, %v709
        %v1070 = vadd.f32 %v1069, %v711
        %v1071 = vadd.f32 %v1070, %v713
        %v1072 = vadd.f32 %v1071, %v715
        %v1073 = vadd.f32 %v1072, %v717
        %v1074 = vadd.f32 %v1073, %v719
        %v1075 = vadd.f32 %v1074, %v721
        %v1076 = vadd.f32 %v1075, %v723
        %v1077 = vadd.f32 %v1076, %v725
        %v1078 = vadd.f32 %v1077, %v727
        %v1079 = vadd.f32 %v1078, %v729
        %v1080 = vadd.f32 %v1079, %v731
        %v1081 = vadd.f32 %v1080, %v733
        %v1082 = vadd.f32 %v1081, %v735
        %v1083 = vadd.f32 %v1082, %v737
        %v1084 = vadd.f32 %v1083, %v739
        %v1085 = vadd.f32 %v1084, %v741
        %v1086 = vadd.f32 %v1085, %v743
        %v1087 = vadd.f32 %v1086, %v745
        %v1088 = vadd.f32 %v1087, %v747
        %v1089 = vadd.f32 %v1088, %v749
        %v1090 = vadd.f32 %v1089, %v751
        %v1091 = vadd.f32 %v1090, %v753
        %v1092 = vadd.f32 %v1091, %v755
        %v1093 = vadd.f32 %v1092, %v757
        %v1094 = vadd.f32 %v1093, %v759
        %v1095 = vadd.f32 %v1094, %v761
        %v1096 = vadd.f32 %v1095, %v763
        %v1097 = vadd.f32 %v1096, %v765
        %v1098 = vadd.f32 %v1097, %v767
        %v1099 = vadd.f32 %v1098, %v769
        %v1100 = vadd.f32 %v1099, %v771
        %v1101 = vadd.f32 %v1100, %v773
        %v1102 = vadd.f32 %v1101, %v775
        %v1103 = vadd.f32 %v1102, %v777
        %v1104 = vadd.f32 %v1103, %v779
        %v1105 = vadd.f32 %v1104, %v781
        %v1106 = vadd.f32 %v1105, %v783
        %v1107 = vadd.f32 %v1106, %v785
        %v1108 = vadd.f32 %v1107, %v787
        %v1109 = vadd.f32 %v1108, %v789
        %v1110 = vadd.f32 %v1109, %v791
        %v1111 = vadd.f32 %v1110, %v793
        %v1112 = vadd.f32 %v1111, %v795
        %v1113 = vadd.f32 %v1112, %v797
        %v1114 = vadd.f32 %v1113, %v799
        %v1115 = vadd.f32 %v1114, %v801
        %v1116 = vadd.f32 %v1115, %v803
        %v1117 = vadd.f32 %v1116, %v805
        %v1118 = vadd.f32 %v1117, %v807
        %v1119 = vadd.f32 %v1118, %v809
        %v1120 = vadd.f32 %v1119, %v811
        %v1121 = vadd.f32 %v1120, %v813
        %v1122 = vadd.f32 %v1121, %v815
        %v1123 = vadd.f32 %v1122, %v817
        %v1124 = vadd.f32 %v1123, %v819
        %v1125 = vadd.f32 %v1124, %v821
        %v1126 = vadd.f32 %v1125, %v823
        %v1127 = vadd.f32 %v1126, %v825
        %v1128 = vadd.f32 %v1127, %v827
        %v1129 = vadd.f32 %v1128, %v829
        %v1130 = vadd.f32 %v1129, %v831
        %v1131 = vadd.f32 %v1130, %v833
        %v1132 = vadd.f32 %v1131, %v835
        %v1133 = vadd.f32 %v1132, %v837
        %v1134 = vadd.f32 %v1133, %v839
        %v1135 = vadd.f32 %v1134, %v841
        %v1136 = vadd.f32 %v1135, %v843
        %v1137 = vadd.f32 %v1136, %v845
        %v1138 = vadd.f32 %v1137, %v847
        %v1139 = vadd.f32 %v1138, %v849
        %v1140 = vadd.f32 %v1139, %v851
        %v1141 = vadd.f32 %v1140, %v853
        %v1142 = vadd.f32 %v1141, %v855
        %v1143 = vadd.f32 %v1142, %v857
        %v1144 = vadd.f32 %v1143, %v859
        %v1145 = vadd.f32 %v1144, %v861
        %v1146 = vadd.f32 %v1145, %v863
        %v1147 = vadd.f32 %v1146, %v865
        %v1148 = vadd.f32 %v1147, %v867
        %v1149 = vadd.f32 %v1148, %v869
        %v1150 = vadd.f32 %v1149, %v871
        %v1151 = vadd.f32 %v1150, %v873
        %v1152 = vadd.f32 %v1151, %v875
        %v1153 = vadd.f32 %v1152, %v877
        %v1154 = vadd.f32 %v1153, %v879
        %v1155 = vadd.f32 %v1154, %v881
        %v1156 = vadd.f32 %v1155, %v883
        %v1157 = vadd.f32 %v1156, %v885
        %v1158 = vadd.f32 %v1157, %v887
        %v1159 = vadd.f32 %v1158, %v889
        %v1160 = vadd.f32 %v1159, %v891
        %v1161 = vadd.f32 %v1160, %v893
        %v1162 = vadd.f32 %v1161, %v895
        %v1163 = vadd.f32 %v1162, %v897
        %v1164 = vadd.f32 %v1163, %v899
        %v1165 = vadd.f32 %v1164, %v901
        %v1166 = vadd.f32 %v1165, %v903
        %v1167 = vadd.f32 %v1166, %v905
        %v1168 = vadd.f32 %v1167, %v907
        %v1169 = vadd.f32 %v1168, %v909
        %v1170 = vadd.f32 %v1169, %v911
        %v1171 = vadd.f32 %v1170, %v913
        %v1172 = vadd.f32 %v1171, %v915
        %v1173 = vadd.f32 %v1172, %v917
        %v1174 = vrot.slane %v1173, 4
        %v1175 = vadd.f32 %v1173, %v1174
        %v1176 = vrot.slane %v1175, 2
        %v1177 = vadd.f32 %v1175, %v1176
        %v1178 = vrot.slane %v1177, 1
        %v1179 = vadd.f32 %v1177, %v1178
        %v1180 = vadd.f32 %v408, %v410
        %v1181 = vadd.f32 %v1180, %v412
        %v1182 = vadd.f32 %v1181, %v414
        %v1183 = vadd.f32 %v1182, %v416
        %v1184 = vadd.f32 %v1183, %v418
        %v1185 = vadd.f32 %v1184, %v420
        %v1186 = vadd.f32 %v1185, %v422
        %v1187 = vadd.f32 %v1186, %v424
        %v1188 = vadd.f32 %v1187, %v426
        %v1189 = vadd.f32 %v1188, %v428
        %v1190 = vadd.f32 %v1189, %v430
        %v1191 = vadd.f32 %v1190, %v432
        %v1192 = vadd.f32 %v1191, %v434
        %v1193 = vadd.f32 %v1192, %v436
        %v1194 = vadd.f32 %v1193, %v438
        %v1195 = vadd.f32 %v1194, %v440
        %v1196 = vadd.f32 %v1195, %v442
        %v1197 = vadd.f32 %v1196, %v444
        %v1198 = vadd.f32 %v1197, %v446
        %v1199 = vadd.f32 %v1198, %v448
        %v1200 = vadd.f32 %v1199, %v450
        %v1201 = vadd.f32 %v1200, %v452
        %v1202 = vadd.f32 %v1201, %v454
        %v1203 = vadd.f32 %v1202, %v456
        %v1204 = vadd.f32 %v1203, %v458
        %v1205 = vadd.f32 %v1204, %v460
        %v1206 = vadd.f32 %v1205, %v462
        %v1207 = vadd.f32 %v1206, %v464
        %v1208 = vadd.f32 %v1207, %v466
        %v1209 = vadd.f32 %v1208, %v468
        %v1210 = vadd.f32 %v1209, %v470
        %v1211 = vadd.f32 %v1210, %v472
        %v1212 = vadd.f32 %v1211, %v474
        %v1213 = vadd.f32 %v1212, %v476
        %v1214 = vadd.f32 %v1213, %v478
        %v1215 = vadd.f32 %v1214, %v480
        %v1216 = vadd.f32 %v1215, %v482
        %v1217 = vadd.f32 %v1216, %v484
        %v1218 = vadd.f32 %v1217, %v486
        %v1219 = vadd.f32 %v1218, %v488
        %v1220 = vadd.f32 %v1219, %v490
        %v1221 = vadd.f32 %v1220, %v492
        %v1222 = vadd.f32 %v1221, %v494
        %v1223 = vadd.f32 %v1222, %v496
        %v1224 = vadd.f32 %v1223, %v498
        %v1225 = vadd.f32 %v1224, %v500
        %v1226 = vadd.f32 %v1225, %v502
        %v1227 = vadd.f32 %v1226, %v504
        %v1228 = vadd.f32 %v1227, %v506
        %v1229 = vadd.f32 %v1228, %v508
        %v1230 = vadd.f32 %v1229, %v510
        %v1231 = vadd.f32 %v1230, %v512
        %v1232 = vadd.f32 %v1231, %v514
        %v1233 = vadd.f32 %v1232, %v516
        %v1234 = vadd.f32 %v1233, %v518
        %v1235 = vadd.f32 %v1234, %v520
        %v1236 = vadd.f32 %v1235, %v522
        %v1237 = vadd.f32 %v1236, %v524
        %v1238 = vadd.f32 %v1237, %v526
        %v1239 = vadd.f32 %v1238, %v528
        %v1240 = vadd.f32 %v1239, %v530
        %v1241 = vadd.f32 %v1240, %v532
        %v1242 = vadd.f32 %v1241, %v534
        %v1243 = vadd.f32 %v1242, %v536
        %v1244 = vadd.f32 %v1243, %v538
        %v1245 = vadd.f32 %v1244, %v540
        %v1246 = vadd.f32 %v1245, %v542
        %v1247 = vadd.f32 %v1246, %v544
        %v1248 = vadd.f32 %v1247, %v546
        %v1249 = vadd.f32 %v1248, %v548
        %v1250 = vadd.f32 %v1249, %v550
        %v1251 = vadd.f32 %v1250, %v552
        %v1252 = vadd.f32 %v1251, %v554
        %v1253 = vadd.f32 %v1252, %v556
        %v1254 = vadd.f32 %v1253, %v558
        %v1255 = vadd.f32 %v1254, %v560
        %v1256 = vadd.f32 %v1255, %v562
        %v1257 = vadd.f32 %v1256, %v564
        %v1258 = vadd.f32 %v1257, %v566
        %v1259 = vadd.f32 %v1258, %v568
        %v1260 = vadd.f32 %v1259, %v570
        %v1261 = vadd.f32 %v1260, %v572
        %v1262 = vadd.f32 %v1261, %v574
        %v1263 = vadd.f32 %v1262, %v576
        %v1264 = vadd.f32 %v1263, %v578
        %v1265 = vadd.f32 %v1264, %v580
        %v1266 = vadd.f32 %v1265, %v582
        %v1267 = vadd.f32 %v1266, %v584
        %v1268 = vadd.f32 %v1267, %v586
        %v1269 = vadd.f32 %v1268, %v588
        %v1270 = vadd.f32 %v1269, %v590
        %v1271 = vadd.f32 %v1270, %v592
        %v1272 = vadd.f32 %v1271, %v594
        %v1273 = vadd.f32 %v1272, %v596
        %v1274 = vadd.f32 %v1273, %v598
        %v1275 = vadd.f32 %v1274, %v600
        %v1276 = vadd.f32 %v1275, %v602
        %v1277 = vadd.f32 %v1276, %v604
        %v1278 = vadd.f32 %v1277, %v606
        %v1279 = vadd.f32 %v1278, %v608
        %v1280 = vadd.f32 %v1279, %v610
        %v1281 = vadd.f32 %v1280, %v612
        %v1282 = vadd.f32 %v1281, %v614
        %v1283 = vadd.f32 %v1282, %v616
        %v1284 = vadd.f32 %v1283, %v618
        %v1285 = vadd.f32 %v1284, %v620
        %v1286 = vadd.f32 %v1285, %v622
        %v1287 = vadd.f32 %v1286, %v624
        %v1288 = vadd.f32 %v1287, %v626
        %v1289 = vadd.f32 %v1288, %v628
        %v1290 = vadd.f32 %v1289, %v630
        %v1291 = vadd.f32 %v1290, %v632
        %v1292 = vadd.f32 %v1291, %v634
        %v1293 = vadd.f32 %v1292, %v636
        %v1294 = vadd.f32 %v1293, %v638
        %v1295 = vadd.f32 %v1294, %v640
        %v1296 = vadd.f32 %v1295, %v642
        %v1297 = vadd.f32 %v1296, %v644
        %v1298 = vadd.f32 %v1297, %v646
        %v1299 = vadd.f32 %v1298, %v648
        %v1300 = vadd.f32 %v1299, %v650
        %v1301 = vadd.f32 %v1300, %v652
        %v1302 = vadd.f32 %v1301, %v654
        %v1303 = vadd.f32 %v1302, %v656
        %v1304 = vadd.f32 %v1303, %v658
        %v1305 = vadd.f32 %v1304, %v660
        %v1306 = vadd.f32 %v1305, %v662
        %v1307 = vadd.f32 %v1306, %v664
        %v1308 = vadd.f32 %v1307, %v666
        %v1309 = vadd.f32 %v1308, %v668
        %v1310 = vadd.f32 %v1309, %v670
        %v1311 = vadd.f32 %v1310, %v672
        %v1312 = vadd.f32 %v1311, %v674
        %v1313 = vadd.f32 %v1312, %v676
        %v1314 = vadd.f32 %v1313, %v678
        %v1315 = vadd.f32 %v1314, %v680
        %v1316 = vadd.f32 %v1315, %v682
        %v1317 = vadd.f32 %v1316, %v684
        %v1318 = vadd.f32 %v1317, %v686
        %v1319 = vadd.f32 %v1318, %v688
        %v1320 = vadd.f32 %v1319, %v690
        %v1321 = vadd.f32 %v1320, %v692
        %v1322 = vadd.f32 %v1321, %v694
        %v1323 = vadd.f32 %v1322, %v696
        %v1324 = vadd.f32 %v1323, %v698
        %v1325 = vadd.f32 %v1324, %v700
        %v1326 = vadd.f32 %v1325, %v702
        %v1327 = vadd.f32 %v1326, %v704
        %v1328 = vadd.f32 %v1327, %v706
        %v1329 = vadd.f32 %v1328, %v708
        %v1330 = vadd.f32 %v1329, %v710
        %v1331 = vadd.f32 %v1330, %v712
        %v1332 = vadd.f32 %v1331, %v714
        %v1333 = vadd.f32 %v1332, %v716
        %v1334 = vadd.f32 %v1333, %v718
        %v1335 = vadd.f32 %v1334, %v720
        %v1336 = vadd.f32 %v1335, %v722
        %v1337 = vadd.f32 %v1336, %v724
        %v1338 = vadd.f32 %v1337, %v726
        %v1339 = vadd.f32 %v1338, %v728
        %v1340 = vadd.f32 %v1339, %v730
        %v1341 = vadd.f32 %v1340, %v732
        %v1342 = vadd.f32 %v1341, %v734
        %v1343 = vadd.f32 %v1342, %v736
        %v1344 = vadd.f32 %v1343, %v738
        %v1345 = vadd.f32 %v1344, %v740
        %v1346 = vadd.f32 %v1345, %v742
        %v1347 = vadd.f32 %v1346, %v744
        %v1348 = vadd.f32 %v1347, %v746
        %v1349 = vadd.f32 %v1348, %v748
        %v1350 = vadd.f32 %v1349, %v750
        %v1351 = vadd.f32 %v1350, %v752
        %v1352 = vadd.f32 %v1351, %v754
        %v1353 = vadd.f32 %v1352, %v756
        %v1354 = vadd.f32 %v1353, %v758
        %v1355 = vadd.f32 %v1354, %v760
        %v1356 = vadd.f32 %v1355, %v762
        %v1357 = vadd.f32 %v1356, %v764
        %v1358 = vadd.f32 %v1357, %v766
        %v1359 = vadd.f32 %v1358, %v768
        %v1360 = vadd.f32 %v1359, %v770
        %v1361 = vadd.f32 %v1360, %v772
        %v1362 = vadd.f32 %v1361, %v774
        %v1363 = vadd.f32 %v1362, %v776
        %v1364 = vadd.f32 %v1363, %v778
        %v1365 = vadd.f32 %v1364, %v780
        %v1366 = vadd.f32 %v1365, %v782
        %v1367 = vadd.f32 %v1366, %v784
        %v1368 = vadd.f32 %v1367, %v786
        %v1369 = vadd.f32 %v1368, %v788
        %v1370 = vadd.f32 %v1369, %v790
        %v1371 = vadd.f32 %v1370, %v792
        %v1372 = vadd.f32 %v1371, %v794
        %v1373 = vadd.f32 %v1372, %v796
        %v1374 = vadd.f32 %v1373, %v798
        %v1375 = vadd.f32 %v1374, %v800
        %v1376 = vadd.f32 %v1375, %v802
        %v1377 = vadd.f32 %v1376, %v804
        %v1378 = vadd.f32 %v1377, %v806
        %v1379 = vadd.f32 %v1378, %v808
        %v1380 = vadd.f32 %v1379, %v810
        %v1381 = vadd.f32 %v1380, %v812
        %v1382 = vadd.f32 %v1381, %v814
        %v1383 = vadd.f32 %v1382, %v816
        %v1384 = vadd.f32 %v1383, %v818
        %v1385 = vadd.f32 %v1384, %v820
        %v1386 = vadd.f32 %v1385, %v822
        %v1387 = vadd.f32 %v1386, %v824
        %v1388 = vadd.f32 %v1387, %v826
        %v1389 = vadd.f32 %v1388, %v828
        %v1390 = vadd.f32 %v1389, %v830
        %v1391 = vadd.f32 %v1390, %v832
        %v1392 = vadd.f32 %v1391, %v834
        %v1393 = vadd.f32 %v1392, %v836
        %v1394 = vadd.f32 %v1393, %v838
        %v1395 = vadd.f32 %v1394, %v840
        %v1396 = vadd.f32 %v1395, %v842
        %v1397 = vadd.f32 %v1396, %v844
        %v1398 = vadd.f32 %v1397, %v846
        %v1399 = vadd.f32 %v1398, %v848
        %v1400 = vadd.f32 %v1399, %v850
        %v1401 = vadd.f32 %v1400, %v852
        %v1402 = vadd.f32 %v1401, %v854
        %v1403 = vadd.f32 %v1402, %v856
        %v1404 = vadd.f32 %v1403, %v858
        %v1405 = vadd.f32 %v1404, %v860
        %v1406 = vadd.f32 %v1405, %v862
        %v1407 = vadd.f32 %v1406, %v864
        %v1408 = vadd.f32 %v1407, %v866
        %v1409 = vadd.f32 %v1408, %v868
        %v1410 = vadd.f32 %v1409, %v870
        %v1411 = vadd.f32 %v1410, %v872
        %v1412 = vadd.f32 %v1411, %v874
        %v1413 = vadd.f32 %v1412, %v876
        %v1414 = vadd.f32 %v1413, %v878
        %v1415 = vadd.f32 %v1414, %v880
        %v1416 = vadd.f32 %v1415, %v882
        %v1417 = vadd.f32 %v1416, %v884
        %v1418 = vadd.f32 %v1417, %v886
        %v1419 = vadd.f32 %v1418, %v888
        %v1420 = vadd.f32 %v1419, %v890
        %v1421 = vadd.f32 %v1420, %v892
        %v1422 = vadd.f32 %v1421, %v894
        %v1423 = vadd.f32 %v1422, %v896
        %v1424 = vadd.f32 %v1423, %v898
        %v1425 = vadd.f32 %v1424, %v900
        %v1426 = vadd.f32 %v1425, %v902
        %v1427 = vadd.f32 %v1426, %v904
        %v1428 = vadd.f32 %v1427, %v906
        %v1429 = vadd.f32 %v1428, %v908
        %v1430 = vadd.f32 %v1429, %v910
        %v1431 = vadd.f32 %v1430, %v912
        %v1432 = vadd.f32 %v1431, %v914
        %v1433 = vadd.f32 %v1432, %v916
        %v1434 = vadd.f32 %v1433, %v918
        %v1435 = vrot.slane %v1434, 4
        %v1436 = vadd.f32 %v1434, %v1435
        %v1437 = vrot.slane %v1436, 2
        %v1438 = vadd.f32 %v1436, %v1437
        %v1439 = vrot.slane %v1438, 1
        %v1440 = vadd.f32 %v1438, %v1439
        %v1441 = vmul.f32 %v407, %v407
        %v1442 = vmul.f32 %v408, %v408
        %v1443 = vmul.f32 %v409, %v409
        %v1444 = vmul.f32 %v410, %v410
        %v1445 = vmul.f32 %v411, %v411
        %v1446 = vmul.f32 %v412, %v412
        %v1447 = vmul.f32 %v413, %v413
        %v1448 = vmul.f32 %v414, %v414
        %v1449 = vmul.f32 %v415, %v415
        %v1450 = vmul.f32 %v416, %v416
        %v1451 = vmul.f32 %v417, %v417
        %v1452 = vmul.f32 %v418, %v418
        %v1453 = vmul.f32 %v419, %v419
        %v1454 = vmul.f32 %v420, %v420
        %v1455 = vmul.f32 %v421, %v421
        %v1456 = vmul.f32 %v422, %v422
        %v1457 = vmul.f32 %v423, %v423
        %v1458 = vmul.f32 %v424, %v424
        %v1459 = vmul.f32 %v425, %v425
        %v1460 = vmul.f32 %v426, %v426
        %v1461 = vmul.f32 %v427, %v427
        %v1462 = vmul.f32 %v428, %v428
        %v1463 = vmul.f32 %v429, %v429
        %v1464 = vmul.f32 %v430, %v430
        %v1465 = vmul.f32 %v431, %v431
        %v1466 = vmul.f32 %v432, %v432
        %v1467 = vmul.f32 %v433, %v433
        %v1468 = vmul.f32 %v434, %v434
        %v1469 = vmul.f32 %v435, %v435
        %v1470 = vmul.f32 %v436, %v436
        %v1471 = vmul.f32 %v437, %v437
        %v1472 = vmul.f32 %v438, %v438
        %v1473 = vmul.f32 %v439, %v439
        %v1474 = vmul.f32 %v440, %v440
        %v1475 = vmul.f32 %v441, %v441
        %v1476 = vmul.f32 %v442, %v442
        %v1477 = vmul.f32 %v443, %v443
        %v1478 = vmul.f32 %v444, %v444
        %v1479 = vmul.f32 %v445, %v445
        %v1480 = vmul.f32 %v446, %v446
        %v1481 = vmul.f32 %v447, %v447
        %v1482 = vmul.f32 %v448, %v448
        %v1483 = vmul.f32 %v449, %v449
        %v1484 = vmul.f32 %v450, %v450
        %v1485 = vmul.f32 %v451, %v451
        %v1486 = vmul.f32 %v452, %v452
        %v1487 = vmul.f32 %v453, %v453
        %v1488 = vmul.f32 %v454, %v454
        %v1489 = vmul.f32 %v455, %v455
        %v1490 = vmul.f32 %v456, %v456
        %v1491 = vmul.f32 %v457, %v457
        %v1492 = vmul.f32 %v458, %v458
        %v1493 = vmul.f32 %v459, %v459
        %v1494 = vmul.f32 %v460, %v460
        %v1495 = vmul.f32 %v461, %v461
        %v1496 = vmul.f32 %v462, %v462
        %v1497 = vmul.f32 %v463, %v463
        %v1498 = vmul.f32 %v464, %v464
        %v1499 = vmul.f32 %v465, %v465
        %v1500 = vmul.f32 %v466, %v466
        %v1501 = vmul.f32 %v467, %v467
        %v1502 = vmul.f32 %v468, %v468
        %v1503 = vmul.f32 %v469, %v469
        %v1504 = vmul.f32 %v470, %v470
        %v1505 = vmul.f32 %v471, %v471
        %v1506 = vmul.f32 %v472, %v472
        %v1507 = vmul.f32 %v473, %v473
        %v1508 = vmul.f32 %v474, %v474
        %v1509 = vmul.f32 %v475, %v475
        %v1510 = vmul.f32 %v476, %v476
        %v1511 = vmul.f32 %v477, %v477
        %v1512 = vmul.f32 %v478, %v478
        %v1513 = vmul.f32 %v479, %v479
        %v1514 = vmul.f32 %v480, %v480
        %v1515 = vmul.f32 %v481, %v481
        %v1516 = vmul.f32 %v482, %v482
        %v1517 = vmul.f32 %v483, %v483
        %v1518 = vmul.f32 %v484, %v484
        %v1519 = vmul.f32 %v485, %v485
        %v1520 = vmul.f32 %v486, %v486
        %v1521 = vmul.f32 %v487, %v487
        %v1522 = vmul.f32 %v488, %v488
        %v1523 = vmul.f32 %v489, %v489
        %v1524 = vmul.f32 %v490, %v490
        %v1525 = vmul.f32 %v491, %v491
        %v1526 = vmul.f32 %v492, %v492
        %v1527 = vmul.f32 %v493, %v493
        %v1528 = vmul.f32 %v494, %v494
        %v1529 = vmul.f32 %v495, %v495
        %v1530 = vmul.f32 %v496, %v496
        %v1531 = vmul.f32 %v497, %v497
        %v1532 = vmul.f32 %v498, %v498
        %v1533 = vmul.f32 %v499, %v499
        %v1534 = vmul.f32 %v500, %v500
        %v1535 = vmul.f32 %v501, %v501
        %v1536 = vmul.f32 %v502, %v502
        %v1537 = vmul.f32 %v503, %v503
        %v1538 = vmul.f32 %v504, %v504
        %v1539 = vmul.f32 %v505, %v505
        %v1540 = vmul.f32 %v506, %v506
        %v1541 = vmul.f32 %v507, %v507
        %v1542 = vmul.f32 %v508, %v508
        %v1543 = vmul.f32 %v509, %v509
        %v1544 = vmul.f32 %v510, %v510
        %v1545 = vmul.f32 %v511, %v511
        %v1546 = vmul.f32 %v512, %v512
        %v1547 = vmul.f32 %v513, %v513
        %v1548 = vmul.f32 %v514, %v514
        %v1549 = vmul.f32 %v515, %v515
        %v1550 = vmul.f32 %v516, %v516
        %v1551 = vmul.f32 %v517, %v517
        %v1552 = vmul.f32 %v518, %v518
        %v1553 = vmul.f32 %v519, %v519
        %v1554 = vmul.f32 %v520, %v520
        %v1555 = vmul.f32 %v521, %v521
        %v1556 = vmul.f32 %v522, %v522
        %v1557 = vmul.f32 %v523, %v523
        %v1558 = vmul.f32 %v524, %v524
        %v1559 = vmul.f32 %v525, %v525
        %v1560 = vmul.f32 %v526, %v526
        %v1561 = vmul.f32 %v527, %v527
        %v1562 = vmul.f32 %v528, %v528
        %v1563 = vmul.f32 %v529, %v529
        %v1564 = vmul.f32 %v530, %v530
        %v1565 = vmul.f32 %v531, %v531
        %v1566 = vmul.f32 %v532, %v532
        %v1567 = vmul.f32 %v533, %v533
        %v1568 = vmul.f32 %v534, %v534
        %v1569 = vmul.f32 %v535, %v535
        %v1570 = vmul.f32 %v536, %v536
        %v1571 = vmul.f32 %v537, %v537
        %v1572 = vmul.f32 %v538, %v538
        %v1573 = vmul.f32 %v539, %v539
        %v1574 = vmul.f32 %v540, %v540
        %v1575 = vmul.f32 %v541, %v541
        %v1576 = vmul.f32 %v542, %v542
        %v1577 = vmul.f32 %v543, %v543
        %v1578 = vmul.f32 %v544, %v544
        %v1579 = vmul.f32 %v545, %v545
        %v1580 = vmul.f32 %v546, %v546
        %v1581 = vmul.f32 %v547, %v547
        %v1582 = vmul.f32 %v548, %v548
        %v1583 = vmul.f32 %v549, %v549
        %v1584 = vmul.f32 %v550, %v550
        %v1585 = vmul.f32 %v551, %v551
        %v1586 = vmul.f32 %v552, %v552
        %v1587 = vmul.f32 %v553, %v553
        %v1588 = vmul.f32 %v554, %v554
        %v1589 = vmul.f32 %v555, %v555
        %v1590 = vmul.f32 %v556, %v556
        %v1591 = vmul.f32 %v557, %v557
        %v1592 = vmul.f32 %v558, %v558
        %v1593 = vmul.f32 %v559, %v559
        %v1594 = vmul.f32 %v560, %v560
        %v1595 = vmul.f32 %v561, %v561
        %v1596 = vmul.f32 %v562, %v562
        %v1597 = vmul.f32 %v563, %v563
        %v1598 = vmul.f32 %v564, %v564
        %v1599 = vmul.f32 %v565, %v565
        %v1600 = vmul.f32 %v566, %v566
        %v1601 = vmul.f32 %v567, %v567
        %v1602 = vmul.f32 %v568, %v568
        %v1603 = vmul.f32 %v569, %v569
        %v1604 = vmul.f32 %v570, %v570
        %v1605 = vmul.f32 %v571, %v571
        %v1606 = vmul.f32 %v572, %v572
        %v1607 = vmul.f32 %v573, %v573
        %v1608 = vmul.f32 %v574, %v574
        %v1609 = vmul.f32 %v575, %v575
        %v1610 = vmul.f32 %v576, %v576
        %v1611 = vmul.f32 %v577, %v577
        %v1612 = vmul.f32 %v578, %v578
        %v1613 = vmul.f32 %v579, %v579
        %v1614 = vmul.f32 %v580, %v580
        %v1615 = vmul.f32 %v581, %v581
        %v1616 = vmul.f32 %v582, %v582
        %v1617 = vmul.f32 %v583, %v583
        %v1618 = vmul.f32 %v584, %v584
        %v1619 = vmul.f32 %v585, %v585
        %v1620 = vmul.f32 %v586, %v586
        %v1621 = vmul.f32 %v587, %v587
        %v1622 = vmul.f32 %v588, %v588
        %v1623 = vmul.f32 %v589, %v589
        %v1624 = vmul.f32 %v590, %v590
        %v1625 = vmul.f32 %v591, %v591
        %v1626 = vmul.f32 %v592, %v592
        %v1627 = vmul.f32 %v593, %v593
        %v1628 = vmul.f32 %v594, %v594
        %v1629 = vmul.f32 %v595, %v595
        %v1630 = vmul.f32 %v596, %v596
        %v1631 = vmul.f32 %v597, %v597
        %v1632 = vmul.f32 %v598, %v598
        %v1633 = vmul.f32 %v599, %v599
        %v1634 = vmul.f32 %v600, %v600
        %v1635 = vmul.f32 %v601, %v601
        %v1636 = vmul.f32 %v602, %v602
        %v1637 = vmul.f32 %v603, %v603
        %v1638 = vmul.f32 %v604, %v604
        %v1639 = vmul.f32 %v605, %v605
        %v1640 = vmul.f32 %v606, %v606
        %v1641 = vmul.f32 %v607, %v607
        %v1642 = vmul.f32 %v608, %v608
        %v1643 = vmul.f32 %v609, %v609
        %v1644 = vmul.f32 %v610, %v610
        %v1645 = vmul.f32 %v611, %v611
        %v1646 = vmul.f32 %v612, %v612
        %v1647 = vmul.f32 %v613, %v613
        %v1648 = vmul.f32 %v614, %v614
        %v1649 = vmul.f32 %v615, %v615
        %v1650 = vmul.f32 %v616, %v616
        %v1651 = vmul.f32 %v617, %v617
        %v1652 = vmul.f32 %v618, %v618
        %v1653 = vmul.f32 %v619, %v619
        %v1654 = vmul.f32 %v620, %v620
        %v1655 = vmul.f32 %v621, %v621
        %v1656 = vmul.f32 %v622, %v622
        %v1657 = vmul.f32 %v623, %v623
        %v1658 = vmul.f32 %v624, %v624
        %v1659 = vmul.f32 %v625, %v625
        %v1660 = vmul.f32 %v626, %v626
        %v1661 = vmul.f32 %v627, %v627
        %v1662 = vmul.f32 %v628, %v628
        %v1663 = vmul.f32 %v629, %v629
        %v1664 = vmul.f32 %v630, %v630
        %v1665 = vmul.f32 %v631, %v631
        %v1666 = vmul.f32 %v632, %v632
        %v1667 = vmul.f32 %v633, %v633
        %v1668 = vmul.f32 %v634, %v634
        %v1669 = vmul.f32 %v635, %v635
        %v1670 = vmul.f32 %v636, %v636
        %v1671 = vmul.f32 %v637, %v637
        %v1672 = vmul.f32 %v638, %v638
        %v1673 = vmul.f32 %v639, %v639
        %v1674 = vmul.f32 %v640, %v640
        %v1675 = vmul.f32 %v641, %v641
        %v1676 = vmul.f32 %v642, %v642
        %v1677 = vmul.f32 %v643, %v643
        %v1678 = vmul.f32 %v644, %v644
        %v1679 = vmul.f32 %v645, %v645
        %v1680 = vmul.f32 %v646, %v646
        %v1681 = vmul.f32 %v647, %v647
        %v1682 = vmul.f32 %v648, %v648
        %v1683 = vmul.f32 %v649, %v649
        %v1684 = vmul.f32 %v650, %v650
        %v1685 = vmul.f32 %v651, %v651
        %v1686 = vmul.f32 %v652, %v652
        %v1687 = vmul.f32 %v653, %v653
        %v1688 = vmul.f32 %v654, %v654
        %v1689 = vmul.f32 %v655, %v655
        %v1690 = vmul.f32 %v656, %v656
        %v1691 = vmul.f32 %v657, %v657
        %v1692 = vmul.f32 %v658, %v658
        %v1693 = vmul.f32 %v659, %v659
        %v1694 = vmul.f32 %v660, %v660
        %v1695 = vmul.f32 %v661, %v661
        %v1696 = vmul.f32 %v662, %v662
        %v1697 = vmul.f32 %v663, %v663
        %v1698 = vmul.f32 %v664, %v664
        %v1699 = vmul.f32 %v665, %v665
        %v1700 = vmul.f32 %v666, %v666
        %v1701 = vmul.f32 %v667, %v667
        %v1702 = vmul.f32 %v668, %v668
        %v1703 = vmul.f32 %v669, %v669
        %v1704 = vmul.f32 %v670, %v670
        %v1705 = vmul.f32 %v671, %v671
        %v1706 = vmul.f32 %v672, %v672
        %v1707 = vmul.f32 %v673, %v673
        %v1708 = vmul.f32 %v674, %v674
        %v1709 = vmul.f32 %v675, %v675
        %v1710 = vmul.f32 %v676, %v676
        %v1711 = vmul.f32 %v677, %v677
        %v1712 = vmul.f32 %v678, %v678
        %v1713 = vmul.f32 %v679, %v679
        %v1714 = vmul.f32 %v680, %v680
        %v1715 = vmul.f32 %v681, %v681
        %v1716 = vmul.f32 %v682, %v682
        %v1717 = vmul.f32 %v683, %v683
        %v1718 = vmul.f32 %v684, %v684
        %v1719 = vmul.f32 %v685, %v685
        %v1720 = vmul.f32 %v686, %v686
        %v1721 = vmul.f32 %v687, %v687
        %v1722 = vmul.f32 %v688, %v688
        %v1723 = vmul.f32 %v689, %v689
        %v1724 = vmul.f32 %v690, %v690
        %v1725 = vmul.f32 %v691, %v691
        %v1726 = vmul.f32 %v692, %v692
        %v1727 = vmul.f32 %v693, %v693
        %v1728 = vmul.f32 %v694, %v694
        %v1729 = vmul.f32 %v695, %v695
        %v1730 = vmul.f32 %v696, %v696
        %v1731 = vmul.f32 %v697, %v697
        %v1732 = vmul.f32 %v698, %v698
        %v1733 = vmul.f32 %v699, %v699
        %v1734 = vmul.f32 %v700, %v700
        %v1735 = vmul.f32 %v701, %v701
        %v1736 = vmul.f32 %v702, %v702
        %v1737 = vmul.f32 %v703, %v703
        %v1738 = vmul.f32 %v704, %v704
        %v1739 = vmul.f32 %v705, %v705
        %v1740 = vmul.f32 %v706, %v706
        %v1741 = vmul.f32 %v707, %v707
        %v1742 = vmul.f32 %v708, %v708
        %v1743 = vmul.f32 %v709, %v709
        %v1744 = vmul.f32 %v710, %v710
        %v1745 = vmul.f32 %v711, %v711
        %v1746 = vmul.f32 %v712, %v712
        %v1747 = vmul.f32 %v713, %v713
        %v1748 = vmul.f32 %v714, %v714
        %v1749 = vmul.f32 %v715, %v715
        %v1750 = vmul.f32 %v716, %v716
        %v1751 = vmul.f32 %v717, %v717
        %v1752 = vmul.f32 %v718, %v718
        %v1753 = vmul.f32 %v719, %v719
        %v1754 = vmul.f32 %v720, %v720
        %v1755 = vmul.f32 %v721, %v721
        %v1756 = vmul.f32 %v722, %v722
        %v1757 = vmul.f32 %v723, %v723
        %v1758 = vmul.f32 %v724, %v724
        %v1759 = vmul.f32 %v725, %v725
        %v1760 = vmul.f32 %v726, %v726
        %v1761 = vmul.f32 %v727, %v727
        %v1762 = vmul.f32 %v728, %v728
        %v1763 = vmul.f32 %v729, %v729
        %v1764 = vmul.f32 %v730, %v730
        %v1765 = vmul.f32 %v731, %v731
        %v1766 = vmul.f32 %v732, %v732
        %v1767 = vmul.f32 %v733, %v733
        %v1768 = vmul.f32 %v734, %v734
        %v1769 = vmul.f32 %v735, %v735
        %v1770 = vmul.f32 %v736, %v736
        %v1771 = vmul.f32 %v737, %v737
        %v1772 = vmul.f32 %v738, %v738
        %v1773 = vmul.f32 %v739, %v739
        %v1774 = vmul.f32 %v740, %v740
        %v1775 = vmul.f32 %v741, %v741
        %v1776 = vmul.f32 %v742, %v742
        %v1777 = vmul.f32 %v743, %v743
        %v1778 = vmul.f32 %v744, %v744
        %v1779 = vmul.f32 %v745, %v745
        %v1780 = vmul.f32 %v746, %v746
        %v1781 = vmul.f32 %v747, %v747
        %v1782 = vmul.f32 %v748, %v748
        %v1783 = vmul.f32 %v749, %v749
        %v1784 = vmul.f32 %v750, %v750
        %v1785 = vmul.f32 %v751, %v751
        %v1786 = vmul.f32 %v752, %v752
        %v1787 = vmul.f32 %v753, %v753
        %v1788 = vmul.f32 %v754, %v754
        %v1789 = vmul.f32 %v755, %v755
        %v1790 = vmul.f32 %v756, %v756
        %v1791 = vmul.f32 %v757, %v757
        %v1792 = vmul.f32 %v758, %v758
        %v1793 = vmul.f32 %v759, %v759
        %v1794 = vmul.f32 %v760, %v760
        %v1795 = vmul.f32 %v761, %v761
        %v1796 = vmul.f32 %v762, %v762
        %v1797 = vmul.f32 %v763, %v763
        %v1798 = vmul.f32 %v764, %v764
        %v1799 = vmul.f32 %v765, %v765
        %v1800 = vmul.f32 %v766, %v766
        %v1801 = vmul.f32 %v767, %v767
        %v1802 = vmul.f32 %v768, %v768
        %v1803 = vmul.f32 %v769, %v769
        %v1804 = vmul.f32 %v770, %v770
        %v1805 = vmul.f32 %v771, %v771
        %v1806 = vmul.f32 %v772, %v772
        %v1807 = vmul.f32 %v773, %v773
        %v1808 = vmul.f32 %v774, %v774
        %v1809 = vmul.f32 %v775, %v775
        %v1810 = vmul.f32 %v776, %v776
        %v1811 = vmul.f32 %v777, %v777
        %v1812 = vmul.f32 %v778, %v778
        %v1813 = vmul.f32 %v779, %v779
        %v1814 = vmul.f32 %v780, %v780
        %v1815 = vmul.f32 %v781, %v781
        %v1816 = vmul.f32 %v782, %v782
        %v1817 = vmul.f32 %v783, %v783
        %v1818 = vmul.f32 %v784, %v784
        %v1819 = vmul.f32 %v785, %v785
        %v1820 = vmul.f32 %v786, %v786
        %v1821 = vmul.f32 %v787, %v787
        %v1822 = vmul.f32 %v788, %v788
        %v1823 = vmul.f32 %v789, %v789
        %v1824 = vmul.f32 %v790, %v790
        %v1825 = vmul.f32 %v791, %v791
        %v1826 = vmul.f32 %v792, %v792
        %v1827 = vmul.f32 %v793, %v793
        %v1828 = vmul.f32 %v794, %v794
        %v1829 = vmul.f32 %v795, %v795
        %v1830 = vmul.f32 %v796, %v796
        %v1831 = vmul.f32 %v797, %v797
        %v1832 = vmul.f32 %v798, %v798
        %v1833 = vmul.f32 %v799, %v799
        %v1834 = vmul.f32 %v800, %v800
        %v1835 = vmul.f32 %v801, %v801
        %v1836 = vmul.f32 %v802, %v802
        %v1837 = vmul.f32 %v803, %v803
        %v1838 = vmul.f32 %v804, %v804
        %v1839 = vmul.f32 %v805, %v805
        %v1840 = vmul.f32 %v806, %v806
        %v1841 = vmul.f32 %v807, %v807
        %v1842 = vmul.f32 %v808, %v808
        %v1843 = vmul.f32 %v809, %v809
        %v1844 = vmul.f32 %v810, %v810
        %v1845 = vmul.f32 %v811, %v811
        %v1846 = vmul.f32 %v812, %v812
        %v1847 = vmul.f32 %v813, %v813
        %v1848 = vmul.f32 %v814, %v814
        %v1849 = vmul.f32 %v815, %v815
        %v1850 = vmul.f32 %v816, %v816
        %v1851 = vmul.f32 %v817, %v817
        %v1852 = vmul.f32 %v818, %v818
        %v1853 = vmul.f32 %v819, %v819
        %v1854 = vmul.f32 %v820, %v820
        %v1855 = vmul.f32 %v821, %v821
        %v1856 = vmul.f32 %v822, %v822
        %v1857 = vmul.f32 %v823, %v823
        %v1858 = vmul.f32 %v824, %v824
        %v1859 = vmul.f32 %v825, %v825
        %v1860 = vmul.f32 %v826, %v826
        %v1861 = vmul.f32 %v827, %v827
        %v1862 = vmul.f32 %v828, %v828
        %v1863 = vmul.f32 %v829, %v829
        %v1864 = vmul.f32 %v830, %v830
        %v1865 = vmul.f32 %v831, %v831
        %v1866 = vmul.f32 %v832, %v832
        %v1867 = vmul.f32 %v833, %v833
        %v1868 = vmul.f32 %v834, %v834
        %v1869 = vmul.f32 %v835, %v835
        %v1870 = vmul.f32 %v836, %v836
        %v1871 = vmul.f32 %v837, %v837
        %v1872 = vmul.f32 %v838, %v838
        %v1873 = vmul.f32 %v839, %v839
        %v1874 = vmul.f32 %v840, %v840
        %v1875 = vmul.f32 %v841, %v841
        %v1876 = vmul.f32 %v842, %v842
        %v1877 = vmul.f32 %v843, %v843
        %v1878 = vmul.f32 %v844, %v844
        %v1879 = vmul.f32 %v845, %v845
        %v1880 = vmul.f32 %v846, %v846
        %v1881 = vmul.f32 %v847, %v847
        %v1882 = vmul.f32 %v848, %v848
        %v1883 = vmul.f32 %v849, %v849
        %v1884 = vmul.f32 %v850, %v850
        %v1885 = vmul.f32 %v851, %v851
        %v1886 = vmul.f32 %v852, %v852
        %v1887 = vmul.f32 %v853, %v853
        %v1888 = vmul.f32 %v854, %v854
        %v1889 = vmul.f32 %v855, %v855
        %v1890 = vmul.f32 %v856, %v856
        %v1891 = vmul.f32 %v857, %v857
        %v1892 = vmul.f32 %v858, %v858
        %v1893 = vmul.f32 %v859, %v859
        %v1894 = vmul.f32 %v860, %v860
        %v1895 = vmul.f32 %v861, %v861
        %v1896 = vmul.f32 %v862, %v862
        %v1897 = vmul.f32 %v863, %v863
        %v1898 = vmul.f32 %v864, %v864
        %v1899 = vmul.f32 %v865, %v865
        %v1900 = vmul.f32 %v866, %v866
        %v1901 = vmul.f32 %v867, %v867
        %v1902 = vmul.f32 %v868, %v868
        %v1903 = vmul.f32 %v869, %v869
        %v1904 = vmul.f32 %v870, %v870
        %v1905 = vmul.f32 %v871, %v871
        %v1906 = vmul.f32 %v872, %v872
        %v1907 = vmul.f32 %v873, %v873
        %v1908 = vmul.f32 %v874, %v874
        %v1909 = vmul.f32 %v875, %v875
        %v1910 = vmul.f32 %v876, %v876
        %v1911 = vmul.f32 %v877, %v877
        %v1912 = vmul.f32 %v878, %v878
        %v1913 = vmul.f32 %v879, %v879
        %v1914 = vmul.f32 %v880, %v880
        %v1915 = vmul.f32 %v881, %v881
        %v1916 = vmul.f32 %v882, %v882
        %v1917 = vmul.f32 %v883, %v883
        %v1918 = vmul.f32 %v884, %v884
        %v1919 = vmul.f32 %v885, %v885
        %v1920 = vmul.f32 %v886, %v886
        %v1921 = vmul.f32 %v887, %v887
        %v1922 = vmul.f32 %v888, %v888
        %v1923 = vmul.f32 %v889, %v889
        %v1924 = vmul.f32 %v890, %v890
        %v1925 = vmul.f32 %v891, %v891
        %v1926 = vmul.f32 %v892, %v892
        %v1927 = vmul.f32 %v893, %v893
        %v1928 = vmul.f32 %v894, %v894
        %v1929 = vmul.f32 %v895, %v895
        %v1930 = vmul.f32 %v896, %v896
        %v1931 = vmul.f32 %v897, %v897
        %v1932 = vmul.f32 %v898, %v898
        %v1933 = vmul.f32 %v899, %v899
        %v1934 = vmul.f32 %v900, %v900
        %v1935 = vmul.f32 %v901, %v901
        %v1936 = vmul.f32 %v902, %v902
        %v1937 = vmul.f32 %v903, %v903
        %v1938 = vmul.f32 %v904, %v904
        %v1939 = vmul.f32 %v905, %v905
        %v1940 = vmul.f32 %v906, %v906
        %v1941 = vmul.f32 %v907, %v907
        %v1942 = vmul.f32 %v908, %v908
        %v1943 = vmul.f32 %v909, %v909
        %v1944 = vmul.f32 %v910, %v910
        %v1945 = vmul.f32 %v911, %v911
        %v1946 = vmul.f32 %v912, %v912
        %v1947 = vmul.f32 %v913, %v913
        %v1948 = vmul.f32 %v914, %v914
        %v1949 = vmul.f32 %v915, %v915
        %v1950 = vmul.f32 %v916, %v916
        %v1951 = vmul.f32 %v917, %v917
        %v1952 = vmul.f32 %v918, %v918
        %v1953 = vadd.f32 %v1441, %v1443
        %v1954 = vadd.f32 %v1953, %v1445
        %v1955 = vadd.f32 %v1954, %v1447
        %v1956 = vadd.f32 %v1955, %v1449
        %v1957 = vadd.f32 %v1956, %v1451
        %v1958 = vadd.f32 %v1957, %v1453
        %v1959 = vadd.f32 %v1958, %v1455
        %v1960 = vadd.f32 %v1959, %v1457
        %v1961 = vadd.f32 %v1960, %v1459
        %v1962 = vadd.f32 %v1961, %v1461
        %v1963 = vadd.f32 %v1962, %v1463
        %v1964 = vadd.f32 %v1963, %v1465
        %v1965 = vadd.f32 %v1964, %v1467
        %v1966 = vadd.f32 %v1965, %v1469
        %v1967 = vadd.f32 %v1966, %v1471
        %v1968 = vadd.f32 %v1967, %v1473
        %v1969 = vadd.f32 %v1968, %v1475
        %v1970 = vadd.f32 %v1969, %v1477
        %v1971 = vadd.f32 %v1970, %v1479
        %v1972 = vadd.f32 %v1971, %v1481
        %v1973 = vadd.f32 %v1972, %v1483
        %v1974 = vadd.f32 %v1973, %v1485
        %v1975 = vadd.f32 %v1974, %v1487
        %v1976 = vadd.f32 %v1975, %v1489
        %v1977 = vadd.f32 %v1976, %v1491
        %v1978 = vadd.f32 %v1977, %v1493
        %v1979 = vadd.f32 %v1978, %v1495
        %v1980 = vadd.f32 %v1979, %v1497
        %v1981 = vadd.f32 %v1980, %v1499
        %v1982 = vadd.f32 %v1981, %v1501
        %v1983 = vadd.f32 %v1982, %v1503
        %v1984 = vadd.f32 %v1983, %v1505
        %v1985 = vadd.f32 %v1984, %v1507
        %v1986 = vadd.f32 %v1985, %v1509
        %v1987 = vadd.f32 %v1986, %v1511
        %v1988 = vadd.f32 %v1987, %v1513
        %v1989 = vadd.f32 %v1988, %v1515
        %v1990 = vadd.f32 %v1989, %v1517
        %v1991 = vadd.f32 %v1990, %v1519
        %v1992 = vadd.f32 %v1991, %v1521
        %v1993 = vadd.f32 %v1992, %v1523
        %v1994 = vadd.f32 %v1993, %v1525
        %v1995 = vadd.f32 %v1994, %v1527
        %v1996 = vadd.f32 %v1995, %v1529
        %v1997 = vadd.f32 %v1996, %v1531
        %v1998 = vadd.f32 %v1997, %v1533
        %v1999 = vadd.f32 %v1998, %v1535
        %v2000 = vadd.f32 %v1999, %v1537
        %v2001 = vadd.f32 %v2000, %v1539
        %v2002 = vadd.f32 %v2001, %v1541
        %v2003 = vadd.f32 %v2002, %v1543
        %v2004 = vadd.f32 %v2003, %v1545
        %v2005 = vadd.f32 %v2004, %v1547
        %v2006 = vadd.f32 %v2005, %v1549
        %v2007 = vadd.f32 %v2006, %v1551
        %v2008 = vadd.f32 %v2007, %v1553
        %v2009 = vadd.f32 %v2008, %v1555
        %v2010 = vadd.f32 %v2009, %v1557
        %v2011 = vadd.f32 %v2010, %v1559
        %v2012 = vadd.f32 %v2011, %v1561
        %v2013 = vadd.f32 %v2012, %v1563
        %v2014 = vadd.f32 %v2013, %v1565
        %v2015 = vadd.f32 %v2014, %v1567
        %v2016 = vadd.f32 %v2015, %v1569
        %v2017 = vadd.f32 %v2016, %v1571
        %v2018 = vadd.f32 %v2017, %v1573
        %v2019 = vadd.f32 %v2018, %v1575
        %v2020 = vadd.f32 %v2019, %v1577
        %v2021 = vadd.f32 %v2020, %v1579
        %v2022 = vadd.f32 %v2021, %v1581
        %v2023 = vadd.f32 %v2022, %v1583
        %v2024 = vadd.f32 %v2023, %v1585
        %v2025 = vadd.f32 %v2024, %v1587
        %v2026 = vadd.f32 %v2025, %v1589
        %v2027 = vadd.f32 %v2026, %v1591
        %v2028 = vadd.f32 %v2027, %v1593
        %v2029 = vadd.f32 %v2028, %v1595
        %v2030 = vadd.f32 %v2029, %v1597
        %v2031 = vadd.f32 %v2030, %v1599
        %v2032 = vadd.f32 %v2031, %v1601
        %v2033 = vadd.f32 %v2032, %v1603
        %v2034 = vadd.f32 %v2033, %v1605
        %v2035 = vadd.f32 %v2034, %v1607
        %v2036 = vadd.f32 %v2035, %v1609
        %v2037 = vadd.f32 %v2036, %v1611
        %v2038 = vadd.f32 %v2037, %v1613
        %v2039 = vadd.f32 %v2038, %v1615
        %v2040 = vadd.f32 %v2039, %v1617
        %v2041 = vadd.f32 %v2040, %v1619
        %v2042 = vadd.f32 %v2041, %v1621
        %v2043 = vadd.f32 %v2042, %v1623
        %v2044 = vadd.f32 %v2043, %v1625
        %v2045 = vadd.f32 %v2044, %v1627
        %v2046 = vadd.f32 %v2045, %v1629
        %v2047 = vadd.f32 %v2046, %v1631
        %v2048 = vadd.f32 %v2047, %v1633
        %v2049 = vadd.f32 %v2048, %v1635
        %v2050 = vadd.f32 %v2049, %v1637
        %v2051 = vadd.f32 %v2050, %v1639
        %v2052 = vadd.f32 %v2051, %v1641
        %v2053 = vadd.f32 %v2052, %v1643
        %v2054 = vadd.f32 %v2053, %v1645
        %v2055 = vadd.f32 %v2054, %v1647
        %v2056 = vadd.f32 %v2055, %v1649
        %v2057 = vadd.f32 %v2056, %v1651
        %v2058 = vadd.f32 %v2057, %v1653
        %v2059 = vadd.f32 %v2058, %v1655
        %v2060 = vadd.f32 %v2059, %v1657
        %v2061 = vadd.f32 %v2060, %v1659
        %v2062 = vadd.f32 %v2061, %v1661
        %v2063 = vadd.f32 %v2062, %v1663
        %v2064 = vadd.f32 %v2063, %v1665
        %v2065 = vadd.f32 %v2064, %v1667
        %v2066 = vadd.f32 %v2065, %v1669
        %v2067 = vadd.f32 %v2066, %v1671
        %v2068 = vadd.f32 %v2067, %v1673
        %v2069 = vadd.f32 %v2068, %v1675
        %v2070 = vadd.f32 %v2069, %v1677
        %v2071 = vadd.f32 %v2070, %v1679
        %v2072 = vadd.f32 %v2071, %v1681
        %v2073 = vadd.f32 %v2072, %v1683
        %v2074 = vadd.f32 %v2073, %v1685
        %v2075 = vadd.f32 %v2074, %v1687
        %v2076 = vadd.f32 %v2075, %v1689
        %v2077 = vadd.f32 %v2076, %v1691
        %v2078 = vadd.f32 %v2077, %v1693
        %v2079 = vadd.f32 %v2078, %v1695
        %v2080 = vadd.f32 %v2079, %v1697
        %v2081 = vadd.f32 %v2080, %v1699
        %v2082 = vadd.f32 %v2081, %v1701
        %v2083 = vadd.f32 %v2082, %v1703
        %v2084 = vadd.f32 %v2083, %v1705
        %v2085 = vadd.f32 %v2084, %v1707
        %v2086 = vadd.f32 %v2085, %v1709
        %v2087 = vadd.f32 %v2086, %v1711
        %v2088 = vadd.f32 %v2087, %v1713
        %v2089 = vadd.f32 %v2088, %v1715
        %v2090 = vadd.f32 %v2089, %v1717
        %v2091 = vadd.f32 %v2090, %v1719
        %v2092 = vadd.f32 %v2091, %v1721
        %v2093 = vadd.f32 %v2092, %v1723
        %v2094 = vadd.f32 %v2093, %v1725
        %v2095 = vadd.f32 %v2094, %v1727
        %v2096 = vadd.f32 %v2095, %v1729
        %v2097 = vadd.f32 %v2096, %v1731
        %v2098 = vadd.f32 %v2097, %v1733
        %v2099 = vadd.f32 %v2098, %v1735
        %v2100 = vadd.f32 %v2099, %v1737
        %v2101 = vadd.f32 %v2100, %v1739
        %v2102 = vadd.f32 %v2101, %v1741
        %v2103 = vadd.f32 %v2102, %v1743
        %v2104 = vadd.f32 %v2103, %v1745
        %v2105 = vadd.f32 %v2104, %v1747
        %v2106 = vadd.f32 %v2105, %v1749
        %v2107 = vadd.f32 %v2106, %v1751
        %v2108 = vadd.f32 %v2107, %v1753
        %v2109 = vadd.f32 %v2108, %v1755
        %v2110 = vadd.f32 %v2109, %v1757
        %v2111 = vadd.f32 %v2110, %v1759
        %v2112 = vadd.f32 %v2111, %v1761
        %v2113 = vadd.f32 %v2112, %v1763
        %v2114 = vadd.f32 %v2113, %v1765
        %v2115 = vadd.f32 %v2114, %v1767
        %v2116 = vadd.f32 %v2115, %v1769
        %v2117 = vadd.f32 %v2116, %v1771
        %v2118 = vadd.f32 %v2117, %v1773
        %v2119 = vadd.f32 %v2118, %v1775
        %v2120 = vadd.f32 %v2119, %v1777
        %v2121 = vadd.f32 %v2120, %v1779
        %v2122 = vadd.f32 %v2121, %v1781
        %v2123 = vadd.f32 %v2122, %v1783
        %v2124 = vadd.f32 %v2123, %v1785
        %v2125 = vadd.f32 %v2124, %v1787
        %v2126 = vadd.f32 %v2125, %v1789
        %v2127 = vadd.f32 %v2126, %v1791
        %v2128 = vadd.f32 %v2127, %v1793
        %v2129 = vadd.f32 %v2128, %v1795
        %v2130 = vadd.f32 %v2129, %v1797
        %v2131 = vadd.f32 %v2130, %v1799
        %v2132 = vadd.f32 %v2131, %v1801
        %v2133 = vadd.f32 %v2132, %v1803
        %v2134 = vadd.f32 %v2133, %v1805
        %v2135 = vadd.f32 %v2134, %v1807
        %v2136 = vadd.f32 %v2135, %v1809
        %v2137 = vadd.f32 %v2136, %v1811
        %v2138 = vadd.f32 %v2137, %v1813
        %v2139 = vadd.f32 %v2138, %v1815
        %v2140 = vadd.f32 %v2139, %v1817
        %v2141 = vadd.f32 %v2140, %v1819
        %v2142 = vadd.f32 %v2141, %v1821
        %v2143 = vadd.f32 %v2142, %v1823
        %v2144 = vadd.f32 %v2143, %v1825
        %v2145 = vadd.f32 %v2144, %v1827
        %v2146 = vadd.f32 %v2145, %v1829
        %v2147 = vadd.f32 %v2146, %v1831
        %v2148 = vadd.f32 %v2147, %v1833
        %v2149 = vadd.f32 %v2148, %v1835
        %v2150 = vadd.f32 %v2149, %v1837
        %v2151 = vadd.f32 %v2150, %v1839
        %v2152 = vadd.f32 %v2151, %v1841
        %v2153 = vadd.f32 %v2152, %v1843
        %v2154 = vadd.f32 %v2153, %v1845
        %v2155 = vadd.f32 %v2154, %v1847
        %v2156 = vadd.f32 %v2155, %v1849
        %v2157 = vadd.f32 %v2156, %v1851
        %v2158 = vadd.f32 %v2157, %v1853
        %v2159 = vadd.f32 %v2158, %v1855
        %v2160 = vadd.f32 %v2159, %v1857
        %v2161 = vadd.f32 %v2160, %v1859
        %v2162 = vadd.f32 %v2161, %v1861
        %v2163 = vadd.f32 %v2162, %v1863
        %v2164 = vadd.f32 %v2163, %v1865
        %v2165 = vadd.f32 %v2164, %v1867
        %v2166 = vadd.f32 %v2165, %v1869
        %v2167 = vadd.f32 %v2166, %v1871
        %v2168 = vadd.f32 %v2167, %v1873
        %v2169 = vadd.f32 %v2168, %v1875
        %v2170 = vadd.f32 %v2169, %v1877
        %v2171 = vadd.f32 %v2170, %v1879
        %v2172 = vadd.f32 %v2171, %v1881
        %v2173 = vadd.f32 %v2172, %v1883
        %v2174 = vadd.f32 %v2173, %v1885
        %v2175 = vadd.f32 %v2174, %v1887
        %v2176 = vadd.f32 %v2175, %v1889
        %v2177 = vadd.f32 %v2176, %v1891
        %v2178 = vadd.f32 %v2177, %v1893
        %v2179 = vadd.f32 %v2178, %v1895
        %v2180 = vadd.f32 %v2179, %v1897
        %v2181 = vadd.f32 %v2180, %v1899
        %v2182 = vadd.f32 %v2181, %v1901
        %v2183 = vadd.f32 %v2182, %v1903
        %v2184 = vadd.f32 %v2183, %v1905
        %v2185 = vadd.f32 %v2184, %v1907
        %v2186 = vadd.f32 %v2185, %v1909
        %v2187 = vadd.f32 %v2186, %v1911
        %v2188 = vadd.f32 %v2187, %v1913
        %v2189 = vadd.f32 %v2188, %v1915
        %v2190 = vadd.f32 %v2189, %v1917
        %v2191 = vadd.f32 %v2190, %v1919
        %v2192 = vadd.f32 %v2191, %v1921
        %v2193 = vadd.f32 %v2192, %v1923
        %v2194 = vadd.f32 %v2193, %v1925
        %v2195 = vadd.f32 %v2194, %v1927
        %v2196 = vadd.f32 %v2195, %v1929
        %v2197 = vadd.f32 %v2196, %v1931
        %v2198 = vadd.f32 %v2197, %v1933
        %v2199 = vadd.f32 %v2198, %v1935
        %v2200 = vadd.f32 %v2199, %v1937
        %v2201 = vadd.f32 %v2200, %v1939
        %v2202 = vadd.f32 %v2201, %v1941
        %v2203 = vadd.f32 %v2202, %v1943
        %v2204 = vadd.f32 %v2203, %v1945
        %v2205 = vadd.f32 %v2204, %v1947
        %v2206 = vadd.f32 %v2205, %v1949
        %v2207 = vadd.f32 %v2206, %v1951
        %v2208 = vrot.slane %v2207, 4
        %v2209 = vadd.f32 %v2207, %v2208
        %v2210 = vrot.slane %v2209, 2
        %v2211 = vadd.f32 %v2209, %v2210
        %v2212 = vrot.slane %v2211, 1
        %v2213 = vadd.f32 %v2211, %v2212
        %v2214 = vadd.f32 %v1442, %v1444
        %v2215 = vadd.f32 %v2214, %v1446
        %v2216 = vadd.f32 %v2215, %v1448
        %v2217 = vadd.f32 %v2216, %v1450
        %v2218 = vadd.f32 %v2217, %v1452
        %v2219 = vadd.f32 %v2218, %v1454
        %v2220 = vadd.f32 %v2219, %v1456
        %v2221 = vadd.f32 %v2220, %v1458
        %v2222 = vadd.f32 %v2221, %v1460
        %v2223 = vadd.f32 %v2222, %v1462
        %v2224 = vadd.f32 %v2223, %v1464
        %v2225 = vadd.f32 %v2224, %v1466
        %v2226 = vadd.f32 %v2225, %v1468
        %v2227 = vadd.f32 %v2226, %v1470
        %v2228 = vadd.f32 %v2227, %v1472
        %v2229 = vadd.f32 %v2228, %v1474
        %v2230 = vadd.f32 %v2229, %v1476
        %v2231 = vadd.f32 %v2230, %v1478
        %v2232 = vadd.f32 %v2231, %v1480
        %v2233 = vadd.f32 %v2232, %v1482
        %v2234 = vadd.f32 %v2233, %v1484
        %v2235 = vadd.f32 %v2234, %v1486
        %v2236 = vadd.f32 %v2235, %v1488
        %v2237 = vadd.f32 %v2236, %v1490
        %v2238 = vadd.f32 %v2237, %v1492
        %v2239 = vadd.f32 %v2238, %v1494
        %v2240 = vadd.f32 %v2239, %v1496
        %v2241 = vadd.f32 %v2240, %v1498
        %v2242 = vadd.f32 %v2241, %v1500
        %v2243 = vadd.f32 %v2242, %v1502
        %v2244 = vadd.f32 %v2243, %v1504
        %v2245 = vadd.f32 %v2244, %v1506
        %v2246 = vadd.f32 %v2245, %v1508
        %v2247 = vadd.f32 %v2246, %v1510
        %v2248 = vadd.f32 %v2247, %v1512
        %v2249 = vadd.f32 %v2248, %v1514
        %v2250 = vadd.f32 %v2249, %v1516
        %v2251 = vadd.f32 %v2250, %v1518
        %v2252 = vadd.f32 %v2251, %v1520
        %v2253 = vadd.f32 %v2252, %v1522
        %v2254 = vadd.f32 %v2253, %v1524
        %v2255 = vadd.f32 %v2254, %v1526
        %v2256 = vadd.f32 %v2255, %v1528
        %v2257 = vadd.f32 %v2256, %v1530
        %v2258 = vadd.f32 %v2257, %v1532
        %v2259 = vadd.f32 %v2258, %v1534
        %v2260 = vadd.f32 %v2259, %v1536
        %v2261 = vadd.f32 %v2260, %v1538
        %v2262 = vadd.f32 %v2261, %v1540
        %v2263 = vadd.f32 %v2262, %v1542
        %v2264 = vadd.f32 %v2263, %v1544
        %v2265 = vadd.f32 %v2264, %v1546
        %v2266 = vadd.f32 %v2265, %v1548
        %v2267 = vadd.f32 %v2266, %v1550
        %v2268 = vadd.f32 %v2267, %v1552
        %v2269 = vadd.f32 %v2268, %v1554
        %v2270 = vadd.f32 %v2269, %v1556
        %v2271 = vadd.f32 %v2270, %v1558
        %v2272 = vadd.f32 %v2271, %v1560
        %v2273 = vadd.f32 %v2272, %v1562
        %v2274 = vadd.f32 %v2273, %v1564
        %v2275 = vadd.f32 %v2274, %v1566
        %v2276 = vadd.f32 %v2275, %v1568
        %v2277 = vadd.f32 %v2276, %v1570
        %v2278 = vadd.f32 %v2277, %v1572
        %v2279 = vadd.f32 %v2278, %v1574
        %v2280 = vadd.f32 %v2279, %v1576
        %v2281 = vadd.f32 %v2280, %v1578
        %v2282 = vadd.f32 %v2281, %v1580
        %v2283 = vadd.f32 %v2282, %v1582
        %v2284 = vadd.f32 %v2283, %v1584
        %v2285 = vadd.f32 %v2284, %v1586
        %v2286 = vadd.f32 %v2285, %v1588
        %v2287 = vadd.f32 %v2286, %v1590
        %v2288 = vadd.f32 %v2287, %v1592
        %v2289 = vadd.f32 %v2288, %v1594
        %v2290 = vadd.f32 %v2289, %v1596
        %v2291 = vadd.f32 %v2290, %v1598
        %v2292 = vadd.f32 %v2291, %v1600
        %v2293 = vadd.f32 %v2292, %v1602
        %v2294 = vadd.f32 %v2293, %v1604
        %v2295 = vadd.f32 %v2294, %v1606
        %v2296 = vadd.f32 %v2295, %v1608
        %v2297 = vadd.f32 %v2296, %v1610
        %v2298 = vadd.f32 %v2297, %v1612
        %v2299 = vadd.f32 %v2298, %v1614
        %v2300 = vadd.f32 %v2299, %v1616
        %v2301 = vadd.f32 %v2300, %v1618
        %v2302 = vadd.f32 %v2301, %v1620
        %v2303 = vadd.f32 %v2302, %v1622
        %v2304 = vadd.f32 %v2303, %v1624
        %v2305 = vadd.f32 %v2304, %v1626
        %v2306 = vadd.f32 %v2305, %v1628
        %v2307 = vadd.f32 %v2306, %v1630
        %v2308 = vadd.f32 %v2307, %v1632
        %v2309 = vadd.f32 %v2308, %v1634
        %v2310 = vadd.f32 %v2309, %v1636
        %v2311 = vadd.f32 %v2310, %v1638
        %v2312 = vadd.f32 %v2311, %v1640
        %v2313 = vadd.f32 %v2312, %v1642
        %v2314 = vadd.f32 %v2313, %v1644
        %v2315 = vadd.f32 %v2314, %v1646
        %v2316 = vadd.f32 %v2315, %v1648
        %v2317 = vadd.f32 %v2316, %v1650
        %v2318 = vadd.f32 %v2317, %v1652
        %v2319 = vadd.f32 %v2318, %v1654
        %v2320 = vadd.f32 %v2319, %v1656
        %v2321 = vadd.f32 %v2320, %v1658
        %v2322 = vadd.f32 %v2321, %v1660
        %v2323 = vadd.f32 %v2322, %v1662
        %v2324 = vadd.f32 %v2323, %v1664
        %v2325 = vadd.f32 %v2324, %v1666
        %v2326 = vadd.f32 %v2325, %v1668
        %v2327 = vadd.f32 %v2326, %v1670
        %v2328 = vadd.f32 %v2327, %v1672
        %v2329 = vadd.f32 %v2328, %v1674
        %v2330 = vadd.f32 %v2329, %v1676
        %v2331 = vadd.f32 %v2330, %v1678
        %v2332 = vadd.f32 %v2331, %v1680
        %v2333 = vadd.f32 %v2332, %v1682
        %v2334 = vadd.f32 %v2333, %v1684
        %v2335 = vadd.f32 %v2334, %v1686
        %v2336 = vadd.f32 %v2335, %v1688
        %v2337 = vadd.f32 %v2336, %v1690
        %v2338 = vadd.f32 %v2337, %v1692
        %v2339 = vadd.f32 %v2338, %v1694
        %v2340 = vadd.f32 %v2339, %v1696
        %v2341 = vadd.f32 %v2340, %v1698
        %v2342 = vadd.f32 %v2341, %v1700
        %v2343 = vadd.f32 %v2342, %v1702
        %v2344 = vadd.f32 %v2343, %v1704
        %v2345 = vadd.f32 %v2344, %v1706
        %v2346 = vadd.f32 %v2345, %v1708
        %v2347 = vadd.f32 %v2346, %v1710
        %v2348 = vadd.f32 %v2347, %v1712
        %v2349 = vadd.f32 %v2348, %v1714
        %v2350 = vadd.f32 %v2349, %v1716
        %v2351 = vadd.f32 %v2350, %v1718
        %v2352 = vadd.f32 %v2351, %v1720
        %v2353 = vadd.f32 %v2352, %v1722
        %v2354 = vadd.f32 %v2353, %v1724
        %v2355 = vadd.f32 %v2354, %v1726
        %v2356 = vadd.f32 %v2355, %v1728
        %v2357 = vadd.f32 %v2356, %v1730
        %v2358 = vadd.f32 %v2357, %v1732
        %v2359 = vadd.f32 %v2358, %v1734
        %v2360 = vadd.f32 %v2359, %v1736
        %v2361 = vadd.f32 %v2360, %v1738
        %v2362 = vadd.f32 %v2361, %v1740
        %v2363 = vadd.f32 %v2362, %v1742
        %v2364 = vadd.f32 %v2363, %v1744
        %v2365 = vadd.f32 %v2364, %v1746
        %v2366 = vadd.f32 %v2365, %v1748
        %v2367 = vadd.f32 %v2366, %v1750
        %v2368 = vadd.f32 %v2367, %v1752
        %v2369 = vadd.f32 %v2368, %v1754
        %v2370 = vadd.f32 %v2369, %v1756
        %v2371 = vadd.f32 %v2370, %v1758
        %v2372 = vadd.f32 %v2371, %v1760
        %v2373 = vadd.f32 %v2372, %v1762
        %v2374 = vadd.f32 %v2373, %v1764
        %v2375 = vadd.f32 %v2374, %v1766
        %v2376 = vadd.f32 %v2375, %v1768
        %v2377 = vadd.f32 %v2376, %v1770
        %v2378 = vadd.f32 %v2377, %v1772
        %v2379 = vadd.f32 %v2378, %v1774
        %v2380 = vadd.f32 %v2379, %v1776
        %v2381 = vadd.f32 %v2380, %v1778
        %v2382 = vadd.f32 %v2381, %v1780
        %v2383 = vadd.f32 %v2382, %v1782
        %v2384 = vadd.f32 %v2383, %v1784
        %v2385 = vadd.f32 %v2384, %v1786
        %v2386 = vadd.f32 %v2385, %v1788
        %v2387 = vadd.f32 %v2386, %v1790
        %v2388 = vadd.f32 %v2387, %v1792
        %v2389 = vadd.f32 %v2388, %v1794
        %v2390 = vadd.f32 %v2389, %v1796
        %v2391 = vadd.f32 %v2390, %v1798
        %v2392 = vadd.f32 %v2391, %v1800
        %v2393 = vadd.f32 %v2392, %v1802
        %v2394 = vadd.f32 %v2393, %v1804
        %v2395 = vadd.f32 %v2394, %v1806
        %v2396 = vadd.f32 %v2395, %v1808
        %v2397 = vadd.f32 %v2396, %v1810
        %v2398 = vadd.f32 %v2397, %v1812
        %v2399 = vadd.f32 %v2398, %v1814
        %v2400 = vadd.f32 %v2399, %v1816
        %v2401 = vadd.f32 %v2400, %v1818
        %v2402 = vadd.f32 %v2401, %v1820
        %v2403 = vadd.f32 %v2402, %v1822
        %v2404 = vadd.f32 %v2403, %v1824
        %v2405 = vadd.f32 %v2404, %v1826
        %v2406 = vadd.f32 %v2405, %v1828
        %v2407 = vadd.f32 %v2406, %v1830
        %v2408 = vadd.f32 %v2407, %v1832
        %v2409 = vadd.f32 %v2408, %v1834
        %v2410 = vadd.f32 %v2409, %v1836
        %v2411 = vadd.f32 %v2410, %v1838
        %v2412 = vadd.f32 %v2411, %v1840
        %v2413 = vadd.f32 %v2412, %v1842
        %v2414 = vadd.f32 %v2413, %v1844
        %v2415 = vadd.f32 %v2414, %v1846
        %v2416 = vadd.f32 %v2415, %v1848
        %v2417 = vadd.f32 %v2416, %v1850
        %v2418 = vadd.f32 %v2417, %v1852
        %v2419 = vadd.f32 %v2418, %v1854
        %v2420 = vadd.f32 %v2419, %v1856
        %v2421 = vadd.f32 %v2420, %v1858
        %v2422 = vadd.f32 %v2421, %v1860
        %v2423 = vadd.f32 %v2422, %v1862
        %v2424 = vadd.f32 %v2423, %v1864
        %v2425 = vadd.f32 %v2424, %v1866
        %v2426 = vadd.f32 %v2425, %v1868
        %v2427 = vadd.f32 %v2426, %v1870
        %v2428 = vadd.f32 %v2427, %v1872
        %v2429 = vadd.f32 %v2428, %v1874
        %v2430 = vadd.f32 %v2429, %v1876
        %v2431 = vadd.f32 %v2430, %v1878
        %v2432 = vadd.f32 %v2431, %v1880
        %v2433 = vadd.f32 %v2432, %v1882
        %v2434 = vadd.f32 %v2433, %v1884
        %v2435 = vadd.f32 %v2434, %v1886
        %v2436 = vadd.f32 %v2435, %v1888
        %v2437 = vadd.f32 %v2436, %v1890
        %v2438 = vadd.f32 %v2437, %v1892
        %v2439 = vadd.f32 %v2438, %v1894
        %v2440 = vadd.f32 %v2439, %v1896
        %v2441 = vadd.f32 %v2440, %v1898
        %v2442 = vadd.f32 %v2441, %v1900
        %v2443 = vadd.f32 %v2442, %v1902
        %v2444 = vadd.f32 %v2443, %v1904
        %v2445 = vadd.f32 %v2444, %v1906
        %v2446 = vadd.f32 %v2445, %v1908
        %v2447 = vadd.f32 %v2446, %v1910
        %v2448 = vadd.f32 %v2447, %v1912
        %v2449 = vadd.f32 %v2448, %v1914
        %v2450 = vadd.f32 %v2449, %v1916
        %v2451 = vadd.f32 %v2450, %v1918
        %v2452 = vadd.f32 %v2451, %v1920
        %v2453 = vadd.f32 %v2452, %v1922
        %v2454 = vadd.f32 %v2453, %v1924
        %v2455 = vadd.f32 %v2454, %v1926
        %v2456 = vadd.f32 %v2455, %v1928
        %v2457 = vadd.f32 %v2456, %v1930
        %v2458 = vadd.f32 %v2457, %v1932
        %v2459 = vadd.f32 %v2458, %v1934
        %v2460 = vadd.f32 %v2459, %v1936
        %v2461 = vadd.f32 %v2460, %v1938
        %v2462 = vadd.f32 %v2461, %v1940
        %v2463 = vadd.f32 %v2462, %v1942
        %v2464 = vadd.f32 %v2463, %v1944
        %v2465 = vadd.f32 %v2464, %v1946
        %v2466 = vadd.f32 %v2465, %v1948
        %v2467 = vadd.f32 %v2466, %v1950
        %v2468 = vadd.f32 %v2467, %v1952
        %v2469 = vrot.slane %v2468, 4
        %v2470 = vadd.f32 %v2468, %v2469
        %v2471 = vrot.slane %v2470, 2
        %v2472 = vadd.f32 %v2470, %v2471
        %v2473 = vrot.slane %v2472, 1
        %v2474 = vadd.f32 %v2472, %v2473
        %v2475 = vld [vmem:[#allocation5] sm:$0xf]
        %vm2476 = vcmask 1040384
        %v2477 = vsel %vm2476, %v1179, %v2213
        %v2478 = vsel %vm2476, %v1440, %v2474
        %v2481 = vcombine.low %v2477, %v2478
        %v2483 = vunpack.c.l.s4 1983009808
        %v2484 = vunpack.c.0.s8 %v2483
        %v2485 = vlaneseq
        %v2486 = vshrl.u32 %v2485, 7
        %v2487 = vsub.s32 %v2484, %v2486
        %v2488 = vrot.slane %v2481, %v2487
        %v2490 = vadd.f32 %v2475, %v2488
        %2491 = vst [vmem:[#allocation5] sm:$0xf] %v2490
        // Predicated region
        $region33: #{tpu_custom_call.1} parent=23 // pred_check
          %p2492 = pneg %p74
        $region34: #{tpu_custom_call.1} parent=23 // pred_check_branch
          %2494 = sbr.rel (%p2492) target = $region36
        $region35: #{tpu_custom_call.1} parent=23 // pred_region
          %s2496 = ssub.s32 64, 64
          %2497 = vsyncadd [#allocation4], %s2496
          %s2498 = smul.addr %s20, 2
          %s2499 = smul.addr %s2498, 32
          %s2500 = scalar_lea.hbm %s1, %s2499
          %s2502 = sshll.u32 [#allocation5], 4
          %s2503 = int_to_ptr.vmem [resolvable:$true] %s2502
          %2505 = dma.vmem_to_hbm [thread:$0]  %s2503, 64, %s2500, [#allocation4]
        $region36: #{tpu_custom_call.1} parent=23 // pred_fallthru
          _
        // Predicated region
        $region37: #{tpu_custom_call.1} parent=23 // pred_check
          %p2506 = pneg %p74
        $region38: #{tpu_custom_call.1} parent=23 // pred_check_branch
          %2508 = sbr.rel (%p2506) target = $region40
        $region39: #{tpu_custom_call.1} parent=23 // pred_region
          %2509 = dma.done [#allocation4], 64
        $region40: #{tpu_custom_call.1} parent=23 // pred_fallthru
          _
      $region24: #{tpu_custom_call.1} parent=5 // pred_fallthru
        _
      %p2510 = scmp.le.s32.totalorder 2, %s11
      // Predicated region
      $region41: #{tpu_custom_call.1} parent=5 // pred_check
        %p2511 = pneg %p2510
      $region42: #{tpu_custom_call.1} parent=5 // pred_check_branch
        %2513 = sbr.rel (%p2511) target = $region44
      $region43: #{tpu_custom_call.1} parent=5 // pred_region
        %s2514 = ssub.s32 %s11, 2
      $region44: #{tpu_custom_call.1} parent=5 // pred_fallthru
        _
    $region6: #{tpu_custom_call.1} parent=1 // loop_footer
      %s15 = sadd.s32 1, %s11
    $region7: #{tpu_custom_call.1} parent=1 // loop_footer_branch
      %10 = sbr.rel target = $region3
    $region8: #{tpu_custom_call.1} parent=1 // loop_exit
      _
    %2515 = vsyncpa [#allocation3], 1
    %s2516 = scalar_lea.sflag [#allocation3], 1
    %2517 = vsyncpa %s2516, 1
    %2518 = vsyncpa [#allocation4], 1
    %s2519 = scalar_lea.sflag [#allocation4], 1
    %2520 = vsyncpa %s2519, 1

</llo_original>
